<compile_context>
chip_gen: v7x
topology: tpu7x:2x2x1
jax: 0.10.0
libtpu: 0.0.40
codegen_flags: <defaults>
</compile_context>

<pallas_src>
import jax
import jax.numpy as jnp
from jax.experimental import pallas as pl
from jax.experimental.pallas import tpu as pltpu

# ----------------------------- config (small synthetic BERT) -----------------
VOCAB = 100
HIDDEN = 32
N_LAYERS = 2
N_HEADS = 4
HEAD_DIM = HIDDEN // N_HEADS
INTER = 64
MAX_POS = 16
TYPE_VOCAB = 2
LN_EPS = 1e-12


# ----------------------------- kernel helpers --------------------------------
def _layernorm(x, g, b):
    mu = jnp.mean(x, axis=-1, keepdims=True)
    var = jnp.mean((x - mu) ** 2, axis=-1, keepdims=True)
    return (x - mu) * jax.lax.rsqrt(var + LN_EPS) * g + b


# ----------------------------- fused encoder kernel ---------------------------
def bert_encoder_kernel(h0_ref, bias_ref,
                        wqkv_ref, bqkv_ref, wo_ref, bo_ref, l1g_ref, l1b_ref,
                        wi_ref, bi_ref, wff_ref, bff_ref, l2g_ref, l2b_ref,
                        o_ref):
    layer = pl.program_id(1)
    H = HIDDEN

    # Layer 0: seed the resident residual stream.  The output block doubles as the
    # layer-axis accumulator (its block index is constant across the layer axis),
    # so there is no extra VMEM scratch slab and no final copy.
    @pl.when(layer == 0)
    def _():
        o_ref[...] = h0_ref[...]

    x = o_ref[...]                                          # (S, H) f32 residual
    xb = x.astype(jnp.bfloat16)

    # ---- fused QKV projection: bf16 operands, f32 accumulation ----------------
    # 1/sqrt(HEAD_DIM) is pre-folded into the Q columns of wqkv/bqkv.
    qkv = jnp.dot(xb, wqkv_ref[...],
                  preferred_element_type=jnp.float32) + bqkv_ref[...]   # (S, 3H)

    # heads-as-batch (N_HEADS, S, HEAD_DIM): static lane slices stacked along a new
    # leading (major) axis — avoids lane-dim reshapes while giving batched einsums.
    def split_heads(t):
        return jnp.stack(
            [t[:, n * HEAD_DIM:(n + 1) * HEAD_DIM] for n in range(N_HEADS)],
            axis=0)

    qh = split_heads(qkv[:, 0 * H:1 * H]).astype(jnp.bfloat16)
    kh = split_heads(qkv[:, 1 * H:2 * H]).astype(jnp.bfloat16)
    vh = split_heads(qkv[:, 2 * H:3 * H]).astype(jnp.bfloat16)

    # Scores / softmax in f32; additive key-mask bias precomputed outside kernel.
    s = jnp.einsum('hqd,hkd->hqk', qh, kh,
                   preferred_element_type=jnp.float32)       # (NH, S, S)
    s = s + bias_ref[...]                                    # (1, S) -> keys axis
    s = s - jnp.max(s, axis=-1, keepdims=True)
    p = jnp.exp(s)
    p = p * pl.reciprocal(jnp.sum(p, axis=-1, keepdims=True), approx=True)

    ctx = jnp.einsum('hqk,hkd->hqd', p.astype(jnp.bfloat16), vh,
                     preferred_element_type=jnp.float32)     # (NH, S, HEAD_DIM)

    # Merge heads (lane concat) and run ONE full-depth (H-contraction) output proj.
    ctx2 = jnp.concatenate([ctx[n] for n in range(N_HEADS)], axis=-1)  # (S, H)
    attn = jnp.dot(ctx2.astype(jnp.bfloat16), wo_ref[...],
                   preferred_element_type=jnp.float32) + bo_ref[...]

    h1 = _layernorm(x + attn, l1g_ref[...], l1b_ref[...])

    # ---- feed-forward (bf16 matmuls, f32 elementwise) --------------------------
    ff = jnp.dot(h1.astype(jnp.bfloat16), wi_ref[...],
                 preferred_element_type=jnp.float32) + bi_ref[...]
    # TODO(synk): HF BERT uses erf-based GELU; tanh approximation used here.
    ff = jax.nn.gelu(ff, approximate=True)
    ff = jnp.dot(ff.astype(jnp.bfloat16), wff_ref[...],
                 preferred_element_type=jnp.float32) + bff_ref[...]

    o_ref[...] = _layernorm(h1 + ff, l2g_ref[...], l2b_ref[...])


# ----------------------------- wrapper -----------------------------------------
def bert_encoder(h0, attn_bias, params):
    """h0: (B, S, H) post-embedding-LN activations; attn_bias: (B, 1, S) additive."""
    B, S, H = h0.shape
    BS = B * S
    h0_2d = h0.reshape(BS, H).astype(jnp.float32)

    per_batch2 = lambda b, l: (b, 0)          # one (S, H) slab per batch tile
    per_batch3 = lambda b, l: (b, 0, 0)
    per_layer3 = lambda b, l: (l, 0, 0)       # stream this layer's weight slice

    grid_spec = pltpu.PrefetchScalarGridSpec(
        num_scalar_prefetch=0,
        grid=(B, N_LAYERS),
        in_specs=[
            pl.BlockSpec((S, H), per_batch2),                  # h0 (read at layer 0)
            pl.BlockSpec((None, 1, S), per_batch3),            # additive mask bias
            pl.BlockSpec((None, H, 3 * H), per_layer3),        # Wqkv (bf16, scaled)
            pl.BlockSpec((None, 1, 3 * H), per_layer3),        # bqkv
            pl.BlockSpec((None, H, H), per_layer3),            # Wo (bf16)
            pl.BlockSpec((None, 1, H), per_layer3),            # bo
            pl.BlockSpec((None, 1, H), per_layer3),            # LN1 gamma
            pl.BlockSpec((None, 1, H), per_layer3),            # LN1 beta
            pl.BlockSpec((None, H, INTER), per_layer3),        # Wi (bf16)
            pl.BlockSpec((None, 1, INTER), per_layer3),        # bi
            pl.BlockSpec((None, INTER, H), per_layer3),        # Wff (bf16)
            pl.BlockSpec((None, 1, H), per_layer3),            # bff
            pl.BlockSpec((None, 1, H), per_layer3),            # LN2 gamma
            pl.BlockSpec((None, 1, H), per_layer3),            # LN2 beta
        ],
        out_specs=pl.BlockSpec((S, H), per_batch2),            # resident accumulator
    )

    # Advisory cost hint (weights re-streamed per batch tile + activation traffic).
    flops_bl = (2 * S * H * 3 * H                    # QKV proj
                + 2 * 2 * N_HEADS * S * S * HEAD_DIM  # scores + context
                + 2 * S * H * H                       # output proj
                + 2 * 2 * S * H * INTER)              # FF in + out
    trans_bl = N_HEADS * S * S + S * INTER
    weight_bytes = (2 * (3 * H * H + H * H + 2 * H * INTER)   # bf16 matmul weights
                    + 4 * (3 * H + 5 * H + INTER))            # f32 biases + LN params
    act_bytes = 4 * S * H * 2 + 4 * S                         # h0 read + out write + bias
    cost = pl.CostEstimate(
        flops=B * N_LAYERS * flops_bl,
        transcendentals=B * N_LAYERS * trans_bl,
        bytes_accessed=B * (N_LAYERS * weight_bytes + act_bytes))

    out = pl.pallas_call(
        bert_encoder_kernel,
        out_shape=jax.ShapeDtypeStruct((BS, H), jnp.float32),
        grid_spec=grid_spec,
        compiler_params=pltpu.CompilerParams(
            dimension_semantics=("parallel", "arbitrary"),
            vmem_limit_bytes=64 * 1024 * 1024),
        cost_estimate=cost,
    )(h0_2d, attn_bias.astype(jnp.float32),
      params["wqkv"], params["bqkv"], params["wo"], params["bo"],
      params["ln1_g"], params["ln1_b"],
      params["wi"], params["bi"], params["wff"], params["bff"],
      params["ln2_g"], params["ln2_b"])
    return out.reshape(B, S, H)


# ----------------------------- parameter init ---------------------------------
def init_params(key):
    keys = iter(jax.random.split(key, 16))

    def nrm(shape):
        return (0.02 * jax.random.normal(next(keys), shape)).astype(jnp.float32)

    L, H = N_LAYERS, HIDDEN

    word_emb = nrm((VOCAB, H))
    pos_emb = nrm((MAX_POS, H))
    type_emb = nrm((TYPE_VOCAB, H))

    # Packed QKV with the 1/sqrt(HEAD_DIM) attention scale folded into Q (free).
    wqkv = nrm((L, H, 3 * H))
    bqkv = jnp.zeros((L, 1, 3 * H), jnp.float32)
    scale = 1.0 / (float(HEAD_DIM) ** 0.5)
    qcol_scale = jnp.concatenate([jnp.full((H,), scale, jnp.float32),
                                  jnp.ones((2 * H,), jnp.float32)])
    wqkv = wqkv * qcol_scale
    bqkv = bqkv * qcol_scale

    return {
        "word_emb": word_emb,
        "pos_emb": pos_emb,
        "type_emb": type_emb,
        "emb_ln_g": jnp.ones((1, H), jnp.float32),
        "emb_ln_b": jnp.zeros((1, H), jnp.float32),
        # per-layer weights stacked along a leading layer axis; matmul weights bf16
        # (MXU-native, half the DMA/VMEM), biases and LN params f32.
        "wqkv": wqkv.astype(jnp.bfloat16),
        "bqkv": bqkv,
        "wo": nrm((L, H, H)).astype(jnp.bfloat16),
        "bo": jnp.zeros((L, 1, H), jnp.float32),
        "ln1_g": jnp.ones((L, 1, H), jnp.float32),
        "ln1_b": jnp.zeros((L, 1, H), jnp.float32),
        "wi": nrm((L, H, INTER)).astype(jnp.bfloat16),
        "bi": jnp.zeros((L, 1, INTER), jnp.float32),
        "wff": nrm((L, INTER, H)).astype(jnp.bfloat16),
        "bff": jnp.zeros((L, 1, H), jnp.float32),
        "ln2_g": jnp.ones((L, 1, H), jnp.float32),
        "ln2_b": jnp.zeros((L, 1, H), jnp.float32),
    }


# ----------------------------- BERT forward ------------------------------------
def bert_forward(params, input_ids, attention_mask, token_type_ids):
    B, S = input_ids.shape
    # Embedding lookups (gather) + embedding LayerNorm -- plain-JAX glue (runs once;
    # keeps the pre-LN (B*S, H) slab out of the fused kernel's VMEM budget).
    emb = (params["word_emb"][input_ids]
           + params["pos_emb"][jnp.arange(S)][None, :, :]
           + params["type_emb"][token_type_ids]).astype(jnp.float32)
    mu = jnp.mean(emb, axis=-1, keepdims=True)
    var = jnp.mean((emb - mu) ** 2, axis=-1, keepdims=True)
    h0 = ((emb - mu) * jax.lax.rsqrt(var + LN_EPS)
          * params["emb_ln_g"] + params["emb_ln_b"])

    # Additive key-mask bias, computed once (not per layer in-kernel).
    attn_bias = ((1.0 - attention_mask.astype(jnp.float32)) * -1e9).reshape(B, 1, S)

    last_hidden_state = bert_encoder(h0, attn_bias, params)
    clip_emb = last_hidden_state[:, 0, :]
    return {"clip_emb": clip_emb, "time_emb": last_hidden_state}


# ----------------------------- main ---------------------------------------------
if __name__ == "__main__":
    key = jax.random.PRNGKey(0)
    pkey, ikey = jax.random.split(key)
    params = init_params(pkey)

    B, S = 2, 8
    input_ids = jax.random.randint(ikey, (B, S), 0, VOCAB, dtype=jnp.int32)
    attention_mask = jnp.ones((B, S), jnp.int32).at[1, 6:].set(0)  # ragged mask
    token_type_ids = jnp.zeros((B, S), jnp.int32)

    fwd = jax.jit(bert_forward)
    out = fwd(params, input_ids, attention_mask, token_type_ids)
    jax.block_until_ready(out)

    assert out["clip_emb"].shape == (B, HIDDEN)
    assert out["time_emb"].shape == (B, S, HIDDEN)
    assert bool(jnp.all(jnp.isfinite(out["time_emb"])))
    print("KERNEL_OK")
</pallas_src>

<mosaic_0001>
module attributes {stable_mosaic.version = 11 : i64} {
  func.func @bert_encoder_kernel(%arg0: i32, %arg1: i32, %arg2: memref<8x32xf32, #tpu.memory_space<vmem>>, %arg3: memref<1x1x8xf32, #tpu.memory_space<vmem>>, %arg4: memref<1x32x96xbf16, #tpu.memory_space<vmem>>, %arg5: memref<1x1x96xf32, #tpu.memory_space<vmem>>, %arg6: memref<1x32x32xbf16, #tpu.memory_space<vmem>>, %arg7: memref<1x1x32xf32, #tpu.memory_space<vmem>>, %arg8: memref<1x1x32xf32, #tpu.memory_space<vmem>>, %arg9: memref<1x1x32xf32, #tpu.memory_space<vmem>>, %arg10: memref<1x32x64xbf16, #tpu.memory_space<vmem>>, %arg11: memref<1x1x64xf32, #tpu.memory_space<vmem>>, %arg12: memref<1x64x32xbf16, #tpu.memory_space<vmem>>, %arg13: memref<1x1x32xf32, #tpu.memory_space<vmem>>, %arg14: memref<1x1x32xf32, #tpu.memory_space<vmem>>, %arg15: memref<1x1x32xf32, #tpu.memory_space<vmem>>, %arg16: memref<8x32xf32, #tpu.memory_space<vmem>>) attributes {dimension_semantics = [#tpu.dimension_semantics<parallel>, #tpu.dimension_semantics<arbitrary>], iteration_bounds = array<i64: 2, 2>, scalar_prefetch = 0 : i64, scratch_operands = 0 : i64, tpu.core_type = #tpu.core_type<tc>, window_params = [{transform_indices = @transform_0, window_bounds = array<i64: 8, 32>}, {transform_indices = @transform_1, window_bounds = array<i64: 1, 1, 8>}, {transform_indices = @transform_2, window_bounds = array<i64: 1, 32, 96>}, {transform_indices = @transform_3, window_bounds = array<i64: 1, 1, 96>}, {transform_indices = @transform_4, window_bounds = array<i64: 1, 32, 32>}, {transform_indices = @transform_5, window_bounds = array<i64: 1, 1, 32>}, {transform_indices = @transform_6, window_bounds = array<i64: 1, 1, 32>}, {transform_indices = @transform_7, window_bounds = array<i64: 1, 1, 32>}, {transform_indices = @transform_8, window_bounds = array<i64: 1, 32, 64>}, {transform_indices = @transform_9, window_bounds = array<i64: 1, 1, 64>}, {transform_indices = @transform_10, window_bounds = array<i64: 1, 64, 32>}, {transform_indices = @transform_11, window_bounds = array<i64: 1, 1, 32>}, {transform_indices = @transform_12, window_bounds = array<i64: 1, 1, 32>}, {transform_indices = @transform_13, window_bounds = array<i64: 1, 1, 32>}, {transform_indices = @transform_14, window_bounds = array<i64: 8, 32>}]} {
    %c0_i32 = arith.constant 0 : i32
    %0 = arith.cmpi eq, %arg1, %c0_i32 : i32
    %1 = arith.extui %0 : i1 to i32
    %c0_i32_0 = arith.constant 0 : i32
    %2 = arith.cmpi ne, %1, %c0_i32_0 : i32
    scf.if %2 {
      %c0_64 = arith.constant 0 : index
      %c0_65 = arith.constant 0 : index
      %164 = vector.load %arg2[%c0_64, %c0_65] : memref<8x32xf32, #tpu.memory_space<vmem>>, vector<8x32xf32>
      %c0_66 = arith.constant 0 : index
      %c0_67 = arith.constant 0 : index
      %165 = vector.load %arg16[%c0_66, %c0_67] : memref<8x32xf32, #tpu.memory_space<vmem>>, vector<8x32xf32>
      tpu.vector_store %arg16[%c0_66, %c0_67], %164 {strides = array<i32>} : memref<8x32xf32, #tpu.memory_space<vmem>>, vector<8x32xf32>,
    } else {
    }
    %c0 = arith.constant 0 : index
    %c0_1 = arith.constant 0 : index
    %3 = vector.load %arg16[%c0, %c0_1] : memref<8x32xf32, #tpu.memory_space<vmem>>, vector<8x32xf32>
    %4 = arith.truncf %3 : vector<8x32xf32> to vector<8x32xbf16>
    %c0_2 = arith.constant 0 : index
    %c0_3 = arith.constant 0 : index
    %c0_4 = arith.constant 0 : index
    %5 = vector.load %arg4[%c0_2, %c0_3, %c0_4] : memref<1x32x96xbf16, #tpu.memory_space<vmem>>, vector<1x32x96xbf16>
    %6 = vector.shape_cast %5 : vector<1x32x96xbf16> to vector<32x96xbf16>
    %cst = arith.constant dense<0.000000e+00> : vector<8x96xf32>
    %7 = tpu.matmul %4, %6, %cst {dimension_numbers = #tpu.dot_dimension_numbers<[1], [0], [0], [1], [0, 0, 1, 1], [], []>} : vector<8x32xbf16>, vector<32x96xbf16>, vector<8x96xf32> -> vector<8x96xf32>
    %c0_5 = arith.constant 0 : index
    %c0_6 = arith.constant 0 : index
    %c0_7 = arith.constant 0 : index
    %8 = vector.load %arg5[%c0_5, %c0_6, %c0_7] : memref<1x1x96xf32, #tpu.memory_space<vmem>>, vector<1x1x96xf32>
    %9 = vector.shape_cast %8 : vector<1x1x96xf32> to vector<1x96xf32>
    %10 = vector.broadcast %9 : vector<1x96xf32> to vector<8x96xf32>
    %11 = arith.addf %7, %10 : vector<8x96xf32>
    %12 = vector.extract_strided_slice %11 {offsets = [0, 0], sizes = [8, 32], strides = [1, 1]} : vector<8x96xf32> to vector<8x32xf32>
    %13 = vector.extract_strided_slice %12 {offsets = [0, 0], sizes = [8, 8], strides = [1, 1]} : vector<8x32xf32> to vector<8x8xf32>
    %14 = vector.extract_strided_slice %12 {offsets = [0, 8], sizes = [8, 8], strides = [1, 1]} : vector<8x32xf32> to vector<8x8xf32>
    %15 = vector.extract_strided_slice %12 {offsets = [0, 16], sizes = [8, 8], strides = [1, 1]} : vector<8x32xf32> to vector<8x8xf32>
    %16 = vector.extract_strided_slice %12 {offsets = [0, 24], sizes = [8, 8], strides = [1, 1]} : vector<8x32xf32> to vector<8x8xf32>
    %17 = vector.shape_cast %13 : vector<8x8xf32> to vector<1x8x8xf32>
    %18 = vector.shape_cast %14 : vector<8x8xf32> to vector<1x8x8xf32>
    %19 = vector.shape_cast %15 : vector<8x8xf32> to vector<1x8x8xf32>
    %20 = vector.shape_cast %16 : vector<8x8xf32> to vector<1x8x8xf32>
    %21 = tpu.concatenate %17, %18, %19, %20 in 0 : vector<1x8x8xf32>, vector<1x8x8xf32>, vector<1x8x8xf32>, vector<1x8x8xf32> -> vector<4x8x8xf32>
    %22 = arith.truncf %21 : vector<4x8x8xf32> to vector<4x8x8xbf16>
    %23 = vector.extract_strided_slice %11 {offsets = [0, 32], sizes = [8, 32], strides = [1, 1]} : vector<8x96xf32> to vector<8x32xf32>
    %24 = vector.extract_strided_slice %23 {offsets = [0, 0], sizes = [8, 8], strides = [1, 1]} : vector<8x32xf32> to vector<8x8xf32>
    %25 = vector.extract_strided_slice %23 {offsets = [0, 8], sizes = [8, 8], strides = [1, 1]} : vector<8x32xf32> to vector<8x8xf32>
    %26 = vector.extract_strided_slice %23 {offsets = [0, 16], sizes = [8, 8], strides = [1, 1]} : vector<8x32xf32> to vector<8x8xf32>
    %27 = vector.extract_strided_slice %23 {offsets = [0, 24], sizes = [8, 8], strides = [1, 1]} : vector<8x32xf32> to vector<8x8xf32>
    %28 = vector.shape_cast %24 : vector<8x8xf32> to vector<1x8x8xf32>
    %29 = vector.shape_cast %25 : vector<8x8xf32> to vector<1x8x8xf32>
    %30 = vector.shape_cast %26 : vector<8x8xf32> to vector<1x8x8xf32>
    %31 = vector.shape_cast %27 : vector<8x8xf32> to vector<1x8x8xf32>
    %32 = tpu.concatenate %28, %29, %30, %31 in 0 : vector<1x8x8xf32>, vector<1x8x8xf32>, vector<1x8x8xf32>, vector<1x8x8xf32> -> vector<4x8x8xf32>
    %33 = arith.truncf %32 : vector<4x8x8xf32> to vector<4x8x8xbf16>
    %34 = vector.extract_strided_slice %11 {offsets = [0, 64], sizes = [8, 32], strides = [1, 1]} : vector<8x96xf32> to vector<8x32xf32>
    %35 = vector.extract_strided_slice %34 {offsets = [0, 0], sizes = [8, 8], strides = [1, 1]} : vector<8x32xf32> to vector<8x8xf32>
    %36 = vector.extract_strided_slice %34 {offsets = [0, 8], sizes = [8, 8], strides = [1, 1]} : vector<8x32xf32> to vector<8x8xf32>
    %37 = vector.extract_strided_slice %34 {offsets = [0, 16], sizes = [8, 8], strides = [1, 1]} : vector<8x32xf32> to vector<8x8xf32>
    %38 = vector.extract_strided_slice %34 {offsets = [0, 24], sizes = [8, 8], strides = [1, 1]} : vector<8x32xf32> to vector<8x8xf32>
    %39 = vector.shape_cast %35 : vector<8x8xf32> to vector<1x8x8xf32>
    %40 = vector.shape_cast %36 : vector<8x8xf32> to vector<1x8x8xf32>
    %41 = vector.shape_cast %37 : vector<8x8xf32> to vector<1x8x8xf32>
    %42 = vector.shape_cast %38 : vector<8x8xf32> to vector<1x8x8xf32>
    %43 = tpu.concatenate %39, %40, %41, %42 in 0 : vector<1x8x8xf32>, vector<1x8x8xf32>, vector<1x8x8xf32>, vector<1x8x8xf32> -> vector<4x8x8xf32>
    %44 = arith.truncf %43 : vector<4x8x8xf32> to vector<4x8x8xbf16>
    "tpu.trace_start"() <{level = 10 : i32, message = "hqd,hkd->hqk"}> : () -> ()
    %cst_8 = arith.constant dense<0.000000e+00> : vector<4x8x8xf32>
    %45 = tpu.matmul %22, %33, %cst_8 {dimension_numbers = #tpu.dot_dimension_numbers<[2], [2], [1], [1], [0, 0, 0, 1, 1, 1], [0], [0]>} : vector<4x8x8xbf16>, vector<4x8x8xbf16>, vector<4x8x8xf32> -> vector<4x8x8xf32>
    "tpu.trace_stop"() : () -> ()
    %c0_9 = arith.constant 0 : index
    %c0_10 = arith.constant 0 : index
    %c0_11 = arith.constant 0 : index
    %46 = vector.load %arg3[%c0_9, %c0_10, %c0_11] : memref<1x1x8xf32, #tpu.memory_space<vmem>>, vector<1x1x8xf32>
    %47 = vector.shape_cast %46 : vector<1x1x8xf32> to vector<1x8xf32>
    %48 = vector.shape_cast %47 : vector<1x8xf32> to vector<1x1x8xf32>
    %49 = vector.broadcast %48 : vector<1x1x8xf32> to vector<4x8x8xf32>
    %50 = arith.addf %45, %49 : vector<4x8x8xf32>
    %cst_12 = arith.constant dense<0xFF800000> : vector<4x8xf32>
    %51 = vector.multi_reduction <maximumf>, %50, %cst_12 [2] : vector<4x8x8xf32> to vector<4x8xf32>
    %52 = vector.shape_cast %51 : vector<4x8xf32> to vector<4x8x1xf32>
    %53 = vector.broadcast %52 : vector<4x8x1xf32> to vector<4x8x8xf32>
    %54 = arith.subf %50, %53 : vector<4x8x8xf32>
    %55 = math.exp %54 : vector<4x8x8xf32>
    %cst_13 = arith.constant dense<0.000000e+00> : vector<4x8xf32>
    %56 = vector.multi_reduction <add>, %55, %cst_13 [2] : vector<4x8x8xf32> to vector<4x8xf32>
    %57 = vector.shape_cast %56 : vector<4x8xf32> to vector<4x8x1xf32>
    %58 = tpu.reciprocal %57 {approx = true} : vector<4x8x1xf32> -> vector<4x8x1xf32>
    %59 = vector.broadcast %58 : vector<4x8x1xf32> to vector<4x8x8xf32>
    %60 = arith.mulf %55, %59 : vector<4x8x8xf32>
    %61 = arith.truncf %60 : vector<4x8x8xf32> to vector<4x8x8xbf16>
    "tpu.trace_start"() <{level = 10 : i32, message = "hqk,hkd->hqd"}> : () -> ()
    %cst_14 = arith.constant dense<0.000000e+00> : vector<4x8x8xf32>
    %62 = tpu.matmul %61, %44, %cst_14 {dimension_numbers = #tpu.dot_dimension_numbers<[2], [1], [1], [2], [0, 0, 0, 1, 1, 2], [0], [0]>} : vector<4x8x8xbf16>, vector<4x8x8xbf16>, vector<4x8x8xf32> -> vector<4x8x8xf32>
    "tpu.trace_stop"() : () -> ()
    %63 = vector.extract_strided_slice %62 {offsets = [0, 0, 0], sizes = [1, 8, 8], strides = [1, 1, 1]} : vector<4x8x8xf32> to vector<1x8x8xf32>
    %64 = vector.shape_cast %63 : vector<1x8x8xf32> to vector<8x8xf32>
    %65 = vector.extract_strided_slice %62 {offsets = [1, 0, 0], sizes = [1, 8, 8], strides = [1, 1, 1]} : vector<4x8x8xf32> to vector<1x8x8xf32>
    %66 = vector.shape_cast %65 : vector<1x8x8xf32> to vector<8x8xf32>
    %67 = vector.extract_strided_slice %62 {offsets = [2, 0, 0], sizes = [1, 8, 8], strides = [1, 1, 1]} : vector<4x8x8xf32> to vector<1x8x8xf32>
    %68 = vector.shape_cast %67 : vector<1x8x8xf32> to vector<8x8xf32>
    %69 = vector.extract_strided_slice %62 {offsets = [3, 0, 0], sizes = [1, 8, 8], strides = [1, 1, 1]} : vector<4x8x8xf32> to vector<1x8x8xf32>
    %70 = vector.shape_cast %69 : vector<1x8x8xf32> to vector<8x8xf32>
    %71 = tpu.concatenate %64, %66, %68, %70 in 1 : vector<8x8xf32>, vector<8x8xf32>, vector<8x8xf32>, vector<8x8xf32> -> vector<8x32xf32>
    %72 = arith.truncf %71 : vector<8x32xf32> to vector<8x32xbf16>
    %c0_15 = arith.constant 0 : index
    %c0_16 = arith.constant 0 : index
    %c0_17 = arith.constant 0 : index
    %73 = vector.load %arg6[%c0_15, %c0_16, %c0_17] : memref<1x32x32xbf16, #tpu.memory_space<vmem>>, vector<1x32x32xbf16>
    %74 = vector.shape_cast %73 : vector<1x32x32xbf16> to vector<32x32xbf16>
    %cst_18 = arith.constant dense<0.000000e+00> : vector<8x32xf32>
    %75 = tpu.matmul %72, %74, %cst_18 {dimension_numbers = #tpu.dot_dimension_numbers<[1], [0], [0], [1], [0, 0, 1, 1], [], []>} : vector<8x32xbf16>, vector<32x32xbf16>, vector<8x32xf32> -> vector<8x32xf32>
    %c0_19 = arith.constant 0 : index
    %c0_20 = arith.constant 0 : index
    %c0_21 = arith.constant 0 : index
    %76 = vector.load %arg7[%c0_19, %c0_20, %c0_21] : memref<1x1x32xf32, #tpu.memory_space<vmem>>, vector<1x1x32xf32>
    %77 = vector.shape_cast %76 : vector<1x1x32xf32> to vector<1x32xf32>
    %78 = vector.broadcast %77 : vector<1x32xf32> to vector<8x32xf32>
    %79 = arith.addf %75, %78 : vector<8x32xf32>
    %80 = arith.addf %3, %79 : vector<8x32xf32>
    %c0_22 = arith.constant 0 : index
    %c0_23 = arith.constant 0 : index
    %c0_24 = arith.constant 0 : index
    %81 = vector.load %arg8[%c0_22, %c0_23, %c0_24] : memref<1x1x32xf32, #tpu.memory_space<vmem>>, vector<1x1x32xf32>
    %82 = vector.shape_cast %81 : vector<1x1x32xf32> to vector<1x32xf32>
    %c0_25 = arith.constant 0 : index
    %c0_26 = arith.constant 0 : index
    %c0_27 = arith.constant 0 : index
    %83 = vector.load %arg9[%c0_25, %c0_26, %c0_27] : memref<1x1x32xf32, #tpu.memory_space<vmem>>, vector<1x1x32xf32>
    %84 = vector.shape_cast %83 : vector<1x1x32xf32> to vector<1x32xf32>
    %cst_28 = arith.constant dense<0.000000e+00> : vector<8xf32>
    %85 = vector.multi_reduction <add>, %80, %cst_28 [1] : vector<8x32xf32> to vector<8xf32>
    %86 = vector.shape_cast %85 : vector<8xf32> to vector<8x1xf32>
    %cst_29 = arith.constant 3.200000e+01 : f32
    %87 = vector.broadcast %cst_29 : f32 to vector<8x1xf32>
    %88 = arith.divf %86, %87 : vector<8x1xf32>
    %89 = vector.broadcast %88 : vector<8x1xf32> to vector<8x32xf32>
    %90 = arith.subf %80, %89 : vector<8x32xf32>
    %91 = arith.mulf %90, %90 : vector<8x32xf32>
    %cst_30 = arith.constant dense<0.000000e+00> : vector<8xf32>
    %92 = vector.multi_reduction <add>, %91, %cst_30 [1] : vector<8x32xf32> to vector<8xf32>
    %93 = vector.shape_cast %92 : vector<8xf32> to vector<8x1xf32>
    %cst_31 = arith.constant 3.200000e+01 : f32
    %94 = vector.broadcast %cst_31 : f32 to vector<8x1xf32>
    %95 = arith.divf %93, %94 : vector<8x1xf32>
    %96 = vector.broadcast %88 : vector<8x1xf32> to vector<8x32xf32>
    %97 = arith.subf %80, %96 : vector<8x32xf32>
    %cst_32 = arith.constant 9.99999996E-13 : f32
    %98 = vector.broadcast %cst_32 : f32 to vector<8x1xf32>
    %99 = arith.addf %95, %98 : vector<8x1xf32>
    %100 = math.rsqrt %99 : vector<8x1xf32>
    %101 = vector.broadcast %100 : vector<8x1xf32> to vector<8x32xf32>
    %102 = arith.mulf %97, %101 : vector<8x32xf32>
    %103 = vector.broadcast %82 : vector<1x32xf32> to vector<8x32xf32>
    %104 = arith.mulf %102, %103 : vector<8x32xf32>
    %105 = vector.broadcast %84 : vector<1x32xf32> to vector<8x32xf32>
    %106 = arith.addf %104, %105 : vector<8x32xf32>
    %107 = arith.truncf %106 : vector<8x32xf32> to vector<8x32xbf16>
    %c0_33 = arith.constant 0 : index
    %c0_34 = arith.constant 0 : index
    %c0_35 = arith.constant 0 : index
    %108 = vector.load %arg10[%c0_33, %c0_34, %c0_35] : memref<1x32x64xbf16, #tpu.memory_space<vmem>>, vector<1x32x64xbf16>
    %109 = vector.shape_cast %108 : vector<1x32x64xbf16> to vector<32x64xbf16>
    %cst_36 = arith.constant dense<0.000000e+00> : vector<8x64xf32>
    %110 = tpu.matmul %107, %109, %cst_36 {dimension_numbers = #tpu.dot_dimension_numbers<[1], [0], [0], [1], [0, 0, 1, 1], [], []>} : vector<8x32xbf16>, vector<32x64xbf16>, vector<8x64xf32> -> vector<8x64xf32>
    %c0_37 = arith.constant 0 : index
    %c0_38 = arith.constant 0 : index
    %c0_39 = arith.constant 0 : index
    %111 = vector.load %arg11[%c0_37, %c0_38, %c0_39] : memref<1x1x64xf32, #tpu.memory_space<vmem>>, vector<1x1x64xf32>
    %112 = vector.shape_cast %111 : vector<1x1x64xf32> to vector<1x64xf32>
    %113 = vector.broadcast %112 : vector<1x64xf32> to vector<8x64xf32>
    %114 = arith.addf %110, %113 : vector<8x64xf32>
    %115 = arith.mulf %114, %114 : vector<8x64xf32>
    %116 = arith.mulf %114, %115 : vector<8x64xf32>
    %cst_40 = arith.constant 4.471500e-02 : f32
    %117 = vector.broadcast %cst_40 : f32 to vector<8x64xf32>
    %118 = arith.mulf %117, %116 : vector<8x64xf32>
    %119 = arith.addf %114, %118 : vector<8x64xf32>
    %cst_41 = arith.constant 0.797884583 : f32
    %120 = vector.broadcast %cst_41 : f32 to vector<8x64xf32>
    %121 = arith.mulf %120, %119 : vector<8x64xf32>
    %122 = math.tanh %121 : vector<8x64xf32>
    %cst_42 = arith.constant 1.000000e+00 : f32
    %123 = vector.broadcast %cst_42 : f32 to vector<8x64xf32>
    %124 = arith.addf %123, %122 : vector<8x64xf32>
    %cst_43 = arith.constant 5.000000e-01 : f32
    %125 = vector.broadcast %cst_43 : f32 to vector<8x64xf32>
    %126 = arith.mulf %125, %124 : vector<8x64xf32>
    %127 = arith.mulf %114, %126 : vector<8x64xf32>
    %128 = arith.truncf %127 : vector<8x64xf32> to vector<8x64xbf16>
    %c0_44 = arith.constant 0 : index
    %c0_45 = arith.constant 0 : index
    %c0_46 = arith.constant 0 : index
    %129 = vector.load %arg12[%c0_44, %c0_45, %c0_46] : memref<1x64x32xbf16, #tpu.memory_space<vmem>>, vector<1x64x32xbf16>
    %130 = vector.shape_cast %129 : vector<1x64x32xbf16> to vector<64x32xbf16>
    %cst_47 = arith.constant dense<0.000000e+00> : vector<8x32xf32>
    %131 = tpu.matmul %128, %130, %cst_47 {dimension_numbers = #tpu.dot_dimension_numbers<[1], [0], [0], [1], [0, 0, 1, 1], [], []>} : vector<8x64xbf16>, vector<64x32xbf16>, vector<8x32xf32> -> vector<8x32xf32>
    %c0_48 = arith.constant 0 : index
    %c0_49 = arith.constant 0 : index
    %c0_50 = arith.constant 0 : index
    %132 = vector.load %arg13[%c0_48, %c0_49, %c0_50] : memref<1x1x32xf32, #tpu.memory_space<vmem>>, vector<1x1x32xf32>
    %133 = vector.shape_cast %132 : vector<1x1x32xf32> to vector<1x32xf32>
    %134 = vector.broadcast %133 : vector<1x32xf32> to vector<8x32xf32>
    %135 = arith.addf %131, %134 : vector<8x32xf32>
    %136 = arith.addf %106, %135 : vector<8x32xf32>
    %c0_51 = arith.constant 0 : index
    %c0_52 = arith.constant 0 : index
    %c0_53 = arith.constant 0 : index
    %137 = vector.load %arg14[%c0_51, %c0_52, %c0_53] : memref<1x1x32xf32, #tpu.memory_space<vmem>>, vector<1x1x32xf32>
    %138 = vector.shape_cast %137 : vector<1x1x32xf32> to vector<1x32xf32>
    %c0_54 = arith.constant 0 : index
    %c0_55 = arith.constant 0 : index
    %c0_56 = arith.constant 0 : index
    %139 = vector.load %arg15[%c0_54, %c0_55, %c0_56] : memref<1x1x32xf32, #tpu.memory_space<vmem>>, vector<1x1x32xf32>
    %140 = vector.shape_cast %139 : vector<1x1x32xf32> to vector<1x32xf32>
    %cst_57 = arith.constant dense<0.000000e+00> : vector<8xf32>
    %141 = vector.multi_reduction <add>, %136, %cst_57 [1] : vector<8x32xf32> to vector<8xf32>
    %142 = vector.shape_cast %141 : vector<8xf32> to vector<8x1xf32>
    %cst_58 = arith.constant 3.200000e+01 : f32
    %143 = vector.broadcast %cst_58 : f32 to vector<8x1xf32>
    %144 = arith.divf %142, %143 : vector<8x1xf32>
    %145 = vector.broadcast %144 : vector<8x1xf32> to vector<8x32xf32>
    %146 = arith.subf %136, %145 : vector<8x32xf32>
    %147 = arith.mulf %146, %146 : vector<8x32xf32>
    %cst_59 = arith.constant dense<0.000000e+00> : vector<8xf32>
    %148 = vector.multi_reduction <add>, %147, %cst_59 [1] : vector<8x32xf32> to vector<8xf32>
    %149 = vector.shape_cast %148 : vector<8xf32> to vector<8x1xf32>
    %cst_60 = arith.constant 3.200000e+01 : f32
    %150 = vector.broadcast %cst_60 : f32 to vector<8x1xf32>
    %151 = arith.divf %149, %150 : vector<8x1xf32>
    %152 = vector.broadcast %144 : vector<8x1xf32> to vector<8x32xf32>
    %153 = arith.subf %136, %152 : vector<8x32xf32>
    %cst_61 = arith.constant 9.99999996E-13 : f32
    %154 = vector.broadcast %cst_61 : f32 to vector<8x1xf32>
    %155 = arith.addf %151, %154 : vector<8x1xf32>
    %156 = math.rsqrt %155 : vector<8x1xf32>
    %157 = vector.broadcast %156 : vector<8x1xf32> to vector<8x32xf32>
    %158 = arith.mulf %153, %157 : vector<8x32xf32>
    %159 = vector.broadcast %138 : vector<1x32xf32> to vector<8x32xf32>
    %160 = arith.mulf %158, %159 : vector<8x32xf32>
    %161 = vector.broadcast %140 : vector<1x32xf32> to vector<8x32xf32>
    %162 = arith.addf %160, %161 : vector<8x32xf32>
    %c0_62 = arith.constant 0 : index
    %c0_63 = arith.constant 0 : index
    %163 = vector.load %arg16[%c0_62, %c0_63] : memref<8x32xf32, #tpu.memory_space<vmem>>, vector<8x32xf32>
    tpu.vector_store %arg16[%c0_62, %c0_63], %162 {strides = array<i32>} : memref<8x32xf32, #tpu.memory_space<vmem>>, vector<8x32xf32>,
    return
  }
  func.func @transform_0(%arg0: i32, %arg1: i32) -> (i32, i32) {
    %c0_i32 = arith.constant 0 : i32
    %c0_i32_0 = arith.constant 0 : i32
    return %arg0, %c0_i32 : i32, i32
  }
  func.func @transform_1(%arg0: i32, %arg1: i32) -> (i32, i32, i32) {
    %c0_i32 = arith.constant 0 : i32
    %c0_i32_0 = arith.constant 0 : i32
    %c0_i32_1 = arith.constant 0 : i32
    return %arg0, %c0_i32, %c0_i32_0 : i32, i32, i32
  }
  func.func @transform_2(%arg0: i32, %arg1: i32) -> (i32, i32, i32) {
    %c0_i32 = arith.constant 0 : i32
    %c0_i32_0 = arith.constant 0 : i32
    %c0_i32_1 = arith.constant 0 : i32
    return %arg1, %c0_i32, %c0_i32_0 : i32, i32, i32
  }
  func.func @transform_3(%arg0: i32, %arg1: i32) -> (i32, i32, i32) {
    %c0_i32 = arith.constant 0 : i32
    %c0_i32_0 = arith.constant 0 : i32
    %c0_i32_1 = arith.constant 0 : i32
    return %arg1, %c0_i32, %c0_i32_0 : i32, i32, i32
  }
  func.func @transform_4(%arg0: i32, %arg1: i32) -> (i32, i32, i32) {
    %c0_i32 = arith.constant 0 : i32
    %c0_i32_0 = arith.constant 0 : i32
    %c0_i32_1 = arith.constant 0 : i32
    return %arg1, %c0_i32, %c0_i32_0 : i32, i32, i32
  }
  func.func @transform_5(%arg0: i32, %arg1: i32) -> (i32, i32, i32) {
    %c0_i32 = arith.constant 0 : i32
    %c0_i32_0 = arith.constant 0 : i32
    %c0_i32_1 = arith.constant 0 : i32
    return %arg1, %c0_i32, %c0_i32_0 : i32, i32, i32
  }
  func.func @transform_6(%arg0: i32, %arg1: i32) -> (i32, i32, i32) {
    %c0_i32 = arith.constant 0 : i32
    %c0_i32_0 = arith.constant 0 : i32
    %c0_i32_1 = arith.constant 0 : i32
    return %arg1, %c0_i32, %c0_i32_0 : i32, i32, i32
  }
  func.func @transform_7(%arg0: i32, %arg1: i32) -> (i32, i32, i32) {
    %c0_i32 = arith.constant 0 : i32
    %c0_i32_0 = arith.constant 0 : i32
    %c0_i32_1 = arith.constant 0 : i32
    return %arg1, %c0_i32, %c0_i32_0 : i32, i32, i32
  }
  func.func @transform_8(%arg0: i32, %arg1: i32) -> (i32, i32, i32) {
    %c0_i32 = arith.constant 0 : i32
    %c0_i32_0 = arith.constant 0 : i32
    %c0_i32_1 = arith.constant 0 : i32
    return %arg1, %c0_i32, %c0_i32_0 : i32, i32, i32
  }
  func.func @transform_9(%arg0: i32, %arg1: i32) -> (i32, i32, i32) {
    %c0_i32 = arith.constant 0 : i32
    %c0_i32_0 = arith.constant 0 : i32
    %c0_i32_1 = arith.constant 0 : i32
    return %arg1, %c0_i32, %c0_i32_0 : i32, i32, i32
  }
  func.func @transform_10(%arg0: i32, %arg1: i32) -> (i32, i32, i32) {
    %c0_i32 = arith.constant 0 : i32
    %c0_i32_0 = arith.constant 0 : i32
    %c0_i32_1 = arith.constant 0 : i32
    return %arg1, %c0_i32, %c0_i32_0 : i32, i32, i32
  }
  func.func @transform_11(%arg0: i32, %arg1: i32) -> (i32, i32, i32) {
    %c0_i32 = arith.constant 0 : i32
    %c0_i32_0 = arith.constant 0 : i32
    %c0_i32_1 = arith.constant 0 : i32
    return %arg1, %c0_i32, %c0_i32_0 : i32, i32, i32
  }
  func.func @transform_12(%arg0: i32, %arg1: i32) -> (i32, i32, i32) {
    %c0_i32 = arith.constant 0 : i32
    %c0_i32_0 = arith.constant 0 : i32
    %c0_i32_1 = arith.constant 0 : i32
    return %arg1, %c0_i32, %c0_i32_0 : i32, i32, i32
  }
  func.func @transform_13(%arg0: i32, %arg1: i32) -> (i32, i32, i32) {
    %c0_i32 = arith.constant 0 : i32
    %c0_i32_0 = arith.constant 0 : i32
    %c0_i32_1 = arith.constant 0 : i32
    return %arg1, %c0_i32, %c0_i32_0 : i32, i32, i32
  }
  func.func @transform_14(%arg0: i32, %arg1: i32) -> (i32, i32) {
    %c0_i32 = arith.constant 0 : i32
    %c0_i32_0 = arith.constant 0 : i32
    return %arg0, %c0_i32 : i32, i32
  }
}

</mosaic_0001>

<llo_original>
// kernel: bert_forward.1
$region0: #{bert_forward.1}
  #allocation0 [shape = 'u32[]', space=smem, size = 0x4, offset = 0x4, fixed_abs, tag = 'smem constant byte address 0x4 - core index']
  #allocation1 [shape = 'u32[144,128]{1,0:T(1,128)}', space=vmem, size = 0x12000, scoped, tag = 'internal scratch']
  %s0 = inlined_call_operand.hbm [shape: f32[16,32], index: 0, kind: input, shape index: {}]
  %s1 = inlined_call_operand.hbm [shape: f32[2,1,8], index: 1, kind: input, shape index: {}]
  %s2 = inlined_call_operand.hbm [shape: bf16[2,32,96], index: 2, kind: input, shape index: {}]
  %s3 = inlined_call_operand.hbm [shape: f32[2,1,96], index: 3, kind: input, shape index: {}]
  %s4 = inlined_call_operand.hbm [shape: bf16[2,32,32], index: 4, kind: input, shape index: {}]
  %s5 = inlined_call_operand.hbm [shape: f32[2,1,32], index: 5, kind: input, shape index: {}]
  %s6 = inlined_call_operand.hbm [shape: f32[2,1,32], index: 6, kind: input, shape index: {}]
  %s7 = inlined_call_operand.hbm [shape: f32[2,1,32], index: 7, kind: input, shape index: {}]
  %s8 = inlined_call_operand.hbm [shape: bf16[2,32,64], index: 8, kind: input, shape index: {}]
  %s9 = inlined_call_operand.hbm [shape: f32[2,1,64], index: 9, kind: input, shape index: {}]
  %s10 = inlined_call_operand.hbm [shape: bf16[2,64,32], index: 10, kind: input, shape index: {}]
  %s11 = inlined_call_operand.hbm [shape: f32[2,1,32], index: 11, kind: input, shape index: {}]
  %s12 = inlined_call_operand.hbm [shape: f32[2,1,32], index: 12, kind: input, shape index: {}]
  %s13 = inlined_call_operand.hbm [shape: f32[2,1,32], index: 13, kind: input, shape index: {}]
  %s14 = inlined_call_operand.hbm [shape: f32[16,32], index: 14, kind: output, shape index: {}]
  %s15 = sld [smem:[#allocation0]]
  $region149: #{bert_forward.1} parent=0
    _
  %s17 = ssub.s32 1, %s15
  %s18 = scalar_select 0, %s17, %s15
  $region1: #{bert_forward.1} parent=0
    #allocation2 [shape = 'u8[8192]{0}', space=vmem, size = 0x2000, scoped, tag = 'input window, operand 0']
    #allocation3 [shape = 's32[2]{0}', space=sflag, size = 0x8, scoped, tag = 'scoped memory for bert_forward.1']
    #allocation4 [shape = 's32[2]{0}', space=sflag, size = 0x8, scoped, tag = 'scoped memory for bert_forward.1']
    #allocation5 [shape = 'u8[1024]{0}', space=vmem, size = 0x400, scoped, tag = 'input window, operand 1']
    #allocation6 [shape = 's32[2]{0}', space=sflag, size = 0x8, scoped, tag = 'scoped memory for bert_forward.1']
    #allocation7 [shape = 'u8[16384]{0}', space=vmem, size = 0x4000, scoped, tag = 'input window, operand 2']
    #allocation8 [shape = 'u8[1024]{0}', space=vmem, size = 0x400, scoped, tag = 'input window, operand 3']
    #allocation9 [shape = 's32[2]{0}', space=sflag, size = 0x8, scoped, tag = 'scoped memory for bert_forward.1']
    #allocation10 [shape = 'u8[16384]{0}', space=vmem, size = 0x4000, scoped, tag = 'input window, operand 4']
    #allocation11 [shape = 'u8[1024]{0}', space=vmem, size = 0x400, scoped, tag = 'input window, operand 5']
    #allocation12 [shape = 's32[2]{0}', space=sflag, size = 0x8, scoped, tag = 'scoped memory for bert_forward.1']
    #allocation13 [shape = 'u8[1024]{0}', space=vmem, size = 0x400, scoped, tag = 'input window, operand 6']
    #allocation14 [shape = 'u8[1024]{0}', space=vmem, size = 0x400, scoped, tag = 'input window, operand 7']
    #allocation15 [shape = 's32[2]{0}', space=sflag, size = 0x8, scoped, tag = 'scoped memory for bert_forward.1']
    #allocation16 [shape = 'u8[16384]{0}', space=vmem, size = 0x4000, scoped, tag = 'input window, operand 8']
    #allocation17 [shape = 'u8[1024]{0}', space=vmem, size = 0x400, scoped, tag = 'input window, operand 9']
    #allocation18 [shape = 's32[2]{0}', space=sflag, size = 0x8, scoped, tag = 'scoped memory for bert_forward.1']
    #allocation19 [shape = 'u8[32768]{0}', space=vmem, size = 0x8000, scoped, tag = 'input window, operand 10']
    #allocation20 [shape = 'u8[1024]{0}', space=vmem, size = 0x400, scoped, tag = 'input window, operand 11']
    #allocation21 [shape = 's32[2]{0}', space=sflag, size = 0x8, scoped, tag = 'scoped memory for bert_forward.1']
    #allocation22 [shape = 'u8[1024]{0}', space=vmem, size = 0x400, scoped, tag = 'input window, operand 12']
    #allocation23 [shape = 'u8[1024]{0}', space=vmem, size = 0x400, scoped, tag = 'input window, operand 13']
    #allocation24 [shape = 's32[2]{0}', space=sflag, size = 0x8, scoped, tag = 'scoped memory for bert_forward.1']
    #allocation25 [shape = 'u8[8192]{0}', space=vmem, size = 0x2000, scoped, tag = 'output window, operand 0']
    %19 = vsyncpa [#allocation3], 0
    %s20 = scalar_lea.sflag [#allocation3], 1
    %21 = vsyncpa %s20, 0
    %22 = vsyncpa [#allocation6], 0
    %s23 = scalar_lea.sflag [#allocation6], 1
    %24 = vsyncpa %s23, 0
    %25 = vsyncpa [#allocation9], 0
    %s26 = scalar_lea.sflag [#allocation9], 1
    %27 = vsyncpa %s26, 0
    %28 = vsyncpa [#allocation12], 0
    %s29 = scalar_lea.sflag [#allocation12], 1
    %30 = vsyncpa %s29, 0
    %31 = vsyncpa [#allocation15], 0
    %s32 = scalar_lea.sflag [#allocation15], 1
    %33 = vsyncpa %s32, 0
    %34 = vsyncpa [#allocation18], 0
    %s35 = scalar_lea.sflag [#allocation18], 1
    %36 = vsyncpa %s35, 0
    %37 = vsyncpa [#allocation21], 0
    %s38 = scalar_lea.sflag [#allocation21], 1
    %39 = vsyncpa %s38, 0
    %40 = vsyncpa [#allocation24], 0
    %s41 = scalar_lea.sflag [#allocation24], 1
    %42 = vsyncpa %s41, 0
    %43 = vsyncpa [#allocation4], 0
    %s44 = scalar_lea.sflag [#allocation4], 1
    %45 = vsyncpa %s44, 0
    loop: start=0, step=1, limit=6
    $region2: #{bert_forward.1} parent=1 // loop_pre_header
      _
    $region3: #{bert_forward.1} parent=1 // loop_header
      %s47 = sphi 0, %s51
      %p48 = scmp.ge.s32.totalorder %s47, 6
      %s54 = sphi 0, %s66
      %s55 = sphi 0, %s62
      %s56 = sphi 0, %s54
      %s57 = sphi 0, %s55
      %s58 = sphi 0, %s56
      %s59 = sphi 0, %s57
      %s69 = sphi 0, %s71
      %s72 = sphi 0, %s69
      %s73 = sphi 0, %s72
      %s89 = sphi 0, %s73
      %s95 = sphi 0, %s97
      %s98 = sphi 0, %s95
      %s99 = sphi 0, %s98
      %s115 = sphi 0, %s99
      %s121 = sphi 0, %s123
      %s124 = sphi 0, %s121
      %s125 = sphi 0, %s124
      %s141 = sphi 0, %s125
      %s147 = sphi 0, %s149
      %s150 = sphi 0, %s147
      %s151 = sphi 0, %s150
      %s167 = sphi 0, %s151
      %s173 = sphi 0, %s175
      %s176 = sphi 0, %s173
      %s177 = sphi 0, %s176
      %s193 = sphi 0, %s177
      %s199 = sphi 0, %s201
      %s202 = sphi 0, %s199
      %s203 = sphi 0, %s202
      %s219 = sphi 0, %s203
      %s225 = sphi 0, %s227
      %s228 = sphi 0, %s225
      %s229 = sphi 0, %s228
      %s245 = sphi 0, %s229
      %s251 = sphi 0, %s253
      %s254 = sphi 0, %s251
      %s255 = sphi 0, %s254
      %s271 = sphi 0, %s255
      %s277 = sphi 0, %s279
      %s280 = sphi 0, %s277
      %s281 = sphi 0, %s280
      %s297 = sphi 0, %s281
      %s303 = sphi 0, %s305
      %s306 = sphi 0, %s303
      %s307 = sphi 0, %s306
      %s323 = sphi 0, %s307
      %s329 = sphi 0, %s331
      %s332 = sphi 0, %s329
      %s333 = sphi 0, %s332
      %s349 = sphi 0, %s333
      %s355 = sphi 0, %s357
      %s358 = sphi 0, %s355
      %s359 = sphi 0, %s358
      %s375 = sphi 0, %s359
      %s381 = sphi 0, %s383
      %s384 = sphi 0, %s381
      %s385 = sphi 0, %s384
      %s401 = sphi 0, %s385
      %s407 = sphi 0, %s409
      %s410 = sphi 0, %s407
      %s411 = sphi 0, %s410
      %s427 = sphi 0, %s411
      %s433 = sphi 0, %s435
      %s436 = sphi 0, %s433
      %s437 = sphi 0, %s436
      %s453 = sphi 0, %s437
    $region4: #{bert_forward.1} parent=1 // loop_header_branch
      %50 = sbr.rel (%p48) target = $region8
    $region5: #{bert_forward.1} parent=1 // loop_body
      %s52 = ssub.s32 %s47, 1
      %s53 = ssub.s32 %s47, 2
      %s60 = sadd.s32 1, %s55
      %p61 = scmp.ge.s32.totalorder %s60, 2
      %s62 = scalar_select %p61, 0, %s60
      %s63 = sadd.s32 1, %s54
      %s64 = scalar_select %p61, %s63, %s54
      %p65 = scmp.ge.s32.totalorder %s64, 2
      %s66 = scalar_select %p65, 0, %s64
      %s67 = ssub.s32 %s54, %s66
      %p68 = scmp.eq.s32.totalorder %s67, 0
      %s70 = sadd.s32 %s69, 1
      %s71 = scalar_select %p68, %s69, %s70
      %p74 = pneg %p68
      %p75 = scmp.eq.s32.totalorder %s47, 3
      %p76 = por %p74, %p75
      %p77 = scmp.ne.s32.totalorder %s69, %s72
      %p78 = scmp.eq.s32.totalorder %s47, 0
      %p79 = por %p77, %p78
      %p80 = scmp.ne.s32.totalorder %s69, %s72
      %p81 = scmp.eq.s32.totalorder %s52, 3
      %p82 = por %p80, %p81
      %p83 = scmp.ne.s32.totalorder %s72, %s73
      %p84 = scmp.eq.s32.totalorder %s52, 0
      %p85 = por %p83, %p84
      %p86 = scmp.ne.s32.totalorder %s72, %s73
      %p87 = scmp.eq.s32.totalorder %s53, 3
      %p88 = por %p86, %p87
      %p90 = scmp.ne.s32.totalorder %s73, %s89
      %p91 = scmp.eq.s32.totalorder %s53, 0
      %p92 = por %p90, %p91
      %s93 = ssub.s32 %s54, %s66
      %p94 = scmp.eq.s32.totalorder %s93, 0
      %s96 = sadd.s32 %s95, 1
      %s97 = scalar_select %p94, %s95, %s96
      %p100 = pneg %p94
      %p101 = scmp.eq.s32.totalorder %s47, 3
      %p102 = por %p100, %p101
      %p103 = scmp.ne.s32.totalorder %s95, %s98
      %p104 = scmp.eq.s32.totalorder %s47, 0
      %p105 = por %p103, %p104
      %p106 = scmp.ne.s32.totalorder %s95, %s98
      %p107 = scmp.eq.s32.totalorder %s52, 3
      %p108 = por %p106, %p107
      %p109 = scmp.ne.s32.totalorder %s98, %s99
      %p110 = scmp.eq.s32.totalorder %s52, 0
      %p111 = por %p109, %p110
      %p112 = scmp.ne.s32.totalorder %s98, %s99
      %p113 = scmp.eq.s32.totalorder %s53, 3
      %p114 = por %p112, %p113
      %p116 = scmp.ne.s32.totalorder %s99, %s115
      %p117 = scmp.eq.s32.totalorder %s53, 0
      %p118 = por %p116, %p117
      %s119 = ssub.s32 %s55, %s62
      %p120 = scmp.eq.s32.totalorder %s119, 0
      %s122 = sadd.s32 %s121, 1
      %s123 = scalar_select %p120, %s121, %s122
      %p126 = pneg %p120
      %p127 = scmp.eq.s32.totalorder %s47, 3
      %p128 = por %p126, %p127
      %p129 = scmp.ne.s32.totalorder %s121, %s124
      %p130 = scmp.eq.s32.totalorder %s47, 0
      %p131 = por %p129, %p130
      %p132 = scmp.ne.s32.totalorder %s121, %s124
      %p133 = scmp.eq.s32.totalorder %s52, 3
      %p134 = por %p132, %p133
      %p135 = scmp.ne.s32.totalorder %s124, %s125
      %p136 = scmp.eq.s32.totalorder %s52, 0
      %p137 = por %p135, %p136
      %p138 = scmp.ne.s32.totalorder %s124, %s125
      %p139 = scmp.eq.s32.totalorder %s53, 3
      %p140 = por %p138, %p139
      %p142 = scmp.ne.s32.totalorder %s125, %s141
      %p143 = scmp.eq.s32.totalorder %s53, 0
      %p144 = por %p142, %p143
      %s145 = ssub.s32 %s55, %s62
      %p146 = scmp.eq.s32.totalorder %s145, 0
      %s148 = sadd.s32 %s147, 1
      %s149 = scalar_select %p146, %s147, %s148
      %p152 = pneg %p146
      %p153 = scmp.eq.s32.totalorder %s47, 3
      %p154 = por %p152, %p153
      %p155 = scmp.ne.s32.totalorder %s147, %s150
      %p156 = scmp.eq.s32.totalorder %s47, 0
      %p157 = por %p155, %p156
      %p158 = scmp.ne.s32.totalorder %s147, %s150
      %p159 = scmp.eq.s32.totalorder %s52, 3
      %p160 = por %p158, %p159
      %p161 = scmp.ne.s32.totalorder %s150, %s151
      %p162 = scmp.eq.s32.totalorder %s52, 0
      %p163 = por %p161, %p162
      %p164 = scmp.ne.s32.totalorder %s150, %s151
      %p165 = scmp.eq.s32.totalorder %s53, 3
      %p166 = por %p164, %p165
      %p168 = scmp.ne.s32.totalorder %s151, %s167
      %p169 = scmp.eq.s32.totalorder %s53, 0
      %p170 = por %p168, %p169
      %s171 = ssub.s32 %s55, %s62
      %p172 = scmp.eq.s32.totalorder %s171, 0
      %s174 = sadd.s32 %s173, 1
      %s175 = scalar_select %p172, %s173, %s174
      %p178 = pneg %p172
      %p179 = scmp.eq.s32.totalorder %s47, 3
      %p180 = por %p178, %p179
      %p181 = scmp.ne.s32.totalorder %s173, %s176
      %p182 = scmp.eq.s32.totalorder %s47, 0
      %p183 = por %p181, %p182
      %p184 = scmp.ne.s32.totalorder %s173, %s176
      %p185 = scmp.eq.s32.totalorder %s52, 3
      %p186 = por %p184, %p185
      %p187 = scmp.ne.s32.totalorder %s176, %s177
      %p188 = scmp.eq.s32.totalorder %s52, 0
      %p189 = por %p187, %p188
      %p190 = scmp.ne.s32.totalorder %s176, %s177
      %p191 = scmp.eq.s32.totalorder %s53, 3
      %p192 = por %p190, %p191
      %p194 = scmp.ne.s32.totalorder %s177, %s193
      %p195 = scmp.eq.s32.totalorder %s53, 0
      %p196 = por %p194, %p195
      %s197 = ssub.s32 %s55, %s62
      %p198 = scmp.eq.s32.totalorder %s197, 0
      %s200 = sadd.s32 %s199, 1
      %s201 = scalar_select %p198, %s199, %s200
      %p204 = pneg %p198
      %p205 = scmp.eq.s32.totalorder %s47, 3
      %p206 = por %p204, %p205
      %p207 = scmp.ne.s32.totalorder %s199, %s202
      %p208 = scmp.eq.s32.totalorder %s47, 0
      %p209 = por %p207, %p208
      %p210 = scmp.ne.s32.totalorder %s199, %s202
      %p211 = scmp.eq.s32.totalorder %s52, 3
      %p212 = por %p210, %p211
      %p213 = scmp.ne.s32.totalorder %s202, %s203
      %p214 = scmp.eq.s32.totalorder %s52, 0
      %p215 = por %p213, %p214
      %p216 = scmp.ne.s32.totalorder %s202, %s203
      %p217 = scmp.eq.s32.totalorder %s53, 3
      %p218 = por %p216, %p217
      %p220 = scmp.ne.s32.totalorder %s203, %s219
      %p221 = scmp.eq.s32.totalorder %s53, 0
      %p222 = por %p220, %p221
      %s223 = ssub.s32 %s55, %s62
      %p224 = scmp.eq.s32.totalorder %s223, 0
      %s226 = sadd.s32 %s225, 1
      %s227 = scalar_select %p224, %s225, %s226
      %p230 = pneg %p224
      %p231 = scmp.eq.s32.totalorder %s47, 3
      %p232 = por %p230, %p231
      %p233 = scmp.ne.s32.totalorder %s225, %s228
      %p234 = scmp.eq.s32.totalorder %s47, 0
      %p235 = por %p233, %p234
      %p236 = scmp.ne.s32.totalorder %s225, %s228
      %p237 = scmp.eq.s32.totalorder %s52, 3
      %p238 = por %p236, %p237
      %p239 = scmp.ne.s32.totalorder %s228, %s229
      %p240 = scmp.eq.s32.totalorder %s52, 0
      %p241 = por %p239, %p240
      %p242 = scmp.ne.s32.totalorder %s228, %s229
      %p243 = scmp.eq.s32.totalorder %s53, 3
      %p244 = por %p242, %p243
      %p246 = scmp.ne.s32.totalorder %s229, %s245
      %p247 = scmp.eq.s32.totalorder %s53, 0
      %p248 = por %p246, %p247
      %s249 = ssub.s32 %s55, %s62
      %p250 = scmp.eq.s32.totalorder %s249, 0
      %s252 = sadd.s32 %s251, 1
      %s253 = scalar_select %p250, %s251, %s252
      %p256 = pneg %p250
      %p257 = scmp.eq.s32.totalorder %s47, 3
      %p258 = por %p256, %p257
      %p259 = scmp.ne.s32.totalorder %s251, %s254
      %p260 = scmp.eq.s32.totalorder %s47, 0
      %p261 = por %p259, %p260
      %p262 = scmp.ne.s32.totalorder %s251, %s254
      %p263 = scmp.eq.s32.totalorder %s52, 3
      %p264 = por %p262, %p263
      %p265 = scmp.ne.s32.totalorder %s254, %s255
      %p266 = scmp.eq.s32.totalorder %s52, 0
      %p267 = por %p265, %p266
      %p268 = scmp.ne.s32.totalorder %s254, %s255
      %p269 = scmp.eq.s32.totalorder %s53, 3
      %p270 = por %p268, %p269
      %p272 = scmp.ne.s32.totalorder %s255, %s271
      %p273 = scmp.eq.s32.totalorder %s53, 0
      %p274 = por %p272, %p273
      %s275 = ssub.s32 %s55, %s62
      %p276 = scmp.eq.s32.totalorder %s275, 0
      %s278 = sadd.s32 %s277, 1
      %s279 = scalar_select %p276, %s277, %s278
      %p282 = pneg %p276
      %p283 = scmp.eq.s32.totalorder %s47, 3
      %p284 = por %p282, %p283
      %p285 = scmp.ne.s32.totalorder %s277, %s280
      %p286 = scmp.eq.s32.totalorder %s47, 0
      %p287 = por %p285, %p286
      %p288 = scmp.ne.s32.totalorder %s277, %s280
      %p289 = scmp.eq.s32.totalorder %s52, 3
      %p290 = por %p288, %p289
      %p291 = scmp.ne.s32.totalorder %s280, %s281
      %p292 = scmp.eq.s32.totalorder %s52, 0
      %p293 = por %p291, %p292
      %p294 = scmp.ne.s32.totalorder %s280, %s281
      %p295 = scmp.eq.s32.totalorder %s53, 3
      %p296 = por %p294, %p295
      %p298 = scmp.ne.s32.totalorder %s281, %s297
      %p299 = scmp.eq.s32.totalorder %s53, 0
      %p300 = por %p298, %p299
      %s301 = ssub.s32 %s55, %s62
      %p302 = scmp.eq.s32.totalorder %s301, 0
      %s304 = sadd.s32 %s303, 1
      %s305 = scalar_select %p302, %s303, %s304
      %p308 = pneg %p302
      %p309 = scmp.eq.s32.totalorder %s47, 3
      %p310 = por %p308, %p309
      %p311 = scmp.ne.s32.totalorder %s303, %s306
      %p312 = scmp.eq.s32.totalorder %s47, 0
      %p313 = por %p311, %p312
      %p314 = scmp.ne.s32.totalorder %s303, %s306
      %p315 = scmp.eq.s32.totalorder %s52, 3
      %p316 = por %p314, %p315
      %p317 = scmp.ne.s32.totalorder %s306, %s307
      %p318 = scmp.eq.s32.totalorder %s52, 0
      %p319 = por %p317, %p318
      %p320 = scmp.ne.s32.totalorder %s306, %s307
      %p321 = scmp.eq.s32.totalorder %s53, 3
      %p322 = por %p320, %p321
      %p324 = scmp.ne.s32.totalorder %s307, %s323
      %p325 = scmp.eq.s32.totalorder %s53, 0
      %p326 = por %p324, %p325
      %s327 = ssub.s32 %s55, %s62
      %p328 = scmp.eq.s32.totalorder %s327, 0
      %s330 = sadd.s32 %s329, 1
      %s331 = scalar_select %p328, %s329, %s330
      %p334 = pneg %p328
      %p335 = scmp.eq.s32.totalorder %s47, 3
      %p336 = por %p334, %p335
      %p337 = scmp.ne.s32.totalorder %s329, %s332
      %p338 = scmp.eq.s32.totalorder %s47, 0
      %p339 = por %p337, %p338
      %p340 = scmp.ne.s32.totalorder %s329, %s332
      %p341 = scmp.eq.s32.totalorder %s52, 3
      %p342 = por %p340, %p341
      %p343 = scmp.ne.s32.totalorder %s332, %s333
      %p344 = scmp.eq.s32.totalorder %s52, 0
      %p345 = por %p343, %p344
      %p346 = scmp.ne.s32.totalorder %s332, %s333
      %p347 = scmp.eq.s32.totalorder %s53, 3
      %p348 = por %p346, %p347
      %p350 = scmp.ne.s32.totalorder %s333, %s349
      %p351 = scmp.eq.s32.totalorder %s53, 0
      %p352 = por %p350, %p351
      %s353 = ssub.s32 %s55, %s62
      %p354 = scmp.eq.s32.totalorder %s353, 0
      %s356 = sadd.s32 %s355, 1
      %s357 = scalar_select %p354, %s355, %s356
      %p360 = pneg %p354
      %p361 = scmp.eq.s32.totalorder %s47, 3
      %p362 = por %p360, %p361
      %p363 = scmp.ne.s32.totalorder %s355, %s358
      %p364 = scmp.eq.s32.totalorder %s47, 0
      %p365 = por %p363, %p364
      %p366 = scmp.ne.s32.totalorder %s355, %s358
      %p367 = scmp.eq.s32.totalorder %s52, 3
      %p368 = por %p366, %p367
      %p369 = scmp.ne.s32.totalorder %s358, %s359
      %p370 = scmp.eq.s32.totalorder %s52, 0
      %p371 = por %p369, %p370
      %p372 = scmp.ne.s32.totalorder %s358, %s359
      %p373 = scmp.eq.s32.totalorder %s53, 3
      %p374 = por %p372, %p373
      %p376 = scmp.ne.s32.totalorder %s359, %s375
      %p377 = scmp.eq.s32.totalorder %s53, 0
      %p378 = por %p376, %p377
      %s379 = ssub.s32 %s55, %s62
      %p380 = scmp.eq.s32.totalorder %s379, 0
      %s382 = sadd.s32 %s381, 1
      %s383 = scalar_select %p380, %s381, %s382
      %p386 = pneg %p380
      %p387 = scmp.eq.s32.totalorder %s47, 3
      %p388 = por %p386, %p387
      %p389 = scmp.ne.s32.totalorder %s381, %s384
      %p390 = scmp.eq.s32.totalorder %s47, 0
      %p391 = por %p389, %p390
      %p392 = scmp.ne.s32.totalorder %s381, %s384
      %p393 = scmp.eq.s32.totalorder %s52, 3
      %p394 = por %p392, %p393
      %p395 = scmp.ne.s32.totalorder %s384, %s385
      %p396 = scmp.eq.s32.totalorder %s52, 0
      %p397 = por %p395, %p396
      %p398 = scmp.ne.s32.totalorder %s384, %s385
      %p399 = scmp.eq.s32.totalorder %s53, 3
      %p400 = por %p398, %p399
      %p402 = scmp.ne.s32.totalorder %s385, %s401
      %p403 = scmp.eq.s32.totalorder %s53, 0
      %p404 = por %p402, %p403
      %s405 = ssub.s32 %s55, %s62
      %p406 = scmp.eq.s32.totalorder %s405, 0
      %s408 = sadd.s32 %s407, 1
      %s409 = scalar_select %p406, %s407, %s408
      %p412 = pneg %p406
      %p413 = scmp.eq.s32.totalorder %s47, 3
      %p414 = por %p412, %p413
      %p415 = scmp.ne.s32.totalorder %s407, %s410
      %p416 = scmp.eq.s32.totalorder %s47, 0
      %p417 = por %p415, %p416
      %p418 = scmp.ne.s32.totalorder %s407, %s410
      %p419 = scmp.eq.s32.totalorder %s52, 3
      %p420 = por %p418, %p419
      %p421 = scmp.ne.s32.totalorder %s410, %s411
      %p422 = scmp.eq.s32.totalorder %s52, 0
      %p423 = por %p421, %p422
      %p424 = scmp.ne.s32.totalorder %s410, %s411
      %p425 = scmp.eq.s32.totalorder %s53, 3
      %p426 = por %p424, %p425
      %p428 = scmp.ne.s32.totalorder %s411, %s427
      %p429 = scmp.eq.s32.totalorder %s53, 0
      %p430 = por %p428, %p429
      %s431 = ssub.s32 %s54, %s66
      %p432 = scmp.eq.s32.totalorder %s431, 0
      %s434 = sadd.s32 %s433, 1
      %s435 = scalar_select %p432, %s433, %s434
      %p438 = pneg %p432
      %p439 = scmp.eq.s32.totalorder %s47, 3
      %p440 = por %p438, %p439
      %p441 = scmp.ne.s32.totalorder %s433, %s436
      %p442 = scmp.eq.s32.totalorder %s47, 0
      %p443 = por %p441, %p442
      %p444 = scmp.ne.s32.totalorder %s433, %s436
      %p445 = scmp.eq.s32.totalorder %s52, 3
      %p446 = por %p444, %p445
      %p447 = scmp.ne.s32.totalorder %s436, %s437
      %p448 = scmp.eq.s32.totalorder %s52, 0
      %p449 = por %p447, %p448
      %p450 = scmp.ne.s32.totalorder %s436, %s437
      %p451 = scmp.eq.s32.totalorder %s53, 3
      %p452 = por %p450, %p451
      %p454 = scmp.ne.s32.totalorder %s437, %s453
      %p455 = scmp.eq.s32.totalorder %s53, 0
      %p456 = por %p454, %p455
      %p457 = scmp.le.s32.totalorder 1, %s47
      %p458 = scmp.lt.s32.totalorder %s47, 5
      %p459 = pnand %p457, %p458
      %p460 = pneg %p459
      // Predicated region
      $region9: #{bert_forward.1} parent=5 // pred_check
        _
      $region10: #{bert_forward.1} parent=5 // pred_check_branch
        %462 = sbr.rel (%p459) target = $region12
      $region11: #{bert_forward.1} parent=5 // pred_region
        %s463 = ssub.s32 %s47, 1
      $region12: #{bert_forward.1} parent=5 // pred_fallthru
        _
      %p464 = scmp.lt.s32.totalorder %s47, 4
      // Predicated region
      $region13: #{bert_forward.1} parent=5 // pred_check
        %p465 = pneg %p464
      $region14: #{bert_forward.1} parent=5 // pred_check_branch
        %467 = sbr.rel (%p465) target = $region16
      $region15: #{bert_forward.1} parent=5 // pred_region
        // Predicated region
        $region17: #{bert_forward.1} parent=15 // pred_check
          %p468 = pneg %p79
        $region18: #{bert_forward.1} parent=15 // pred_check_branch
          %470 = sbr.rel (%p468) target = $region20
        $region19: #{bert_forward.1} parent=15 // pred_region
          %s471 = sand.u32 %s69, 1
          %s472 = scalar_lea.sflag [#allocation3], %s471
          %s473 = sand.u32 %s69, 1
          %s474 = smul.addr %s473, 8
          %s475 = scalar_lea.vmem [#allocation2], %s474
          %s477 = ssub.s32 128, 128
          %478 = vsyncadd %s472, %s477
          %s479 = smul.addr %s54, 128
          %s480 = scalar_lea.hbm %s0, %s479
          %s482 = sshll.u32 %s475, 4
          %s483 = int_to_ptr.vmem [resolvable:$true] %s482
          %485 = dma.hbm_to_vmem [thread:$0]  %s480, 128, %s483, %s472
        $region20: #{bert_forward.1} parent=15 // pred_fallthru
          _
        // Predicated region
        $region21: #{bert_forward.1} parent=15 // pred_check
          %p486 = pneg %p105
        $region22: #{bert_forward.1} parent=15 // pred_check_branch
          %488 = sbr.rel (%p486) target = $region24
        $region23: #{bert_forward.1} parent=15 // pred_region
          %s489 = sand.u32 %s47, 1
          %s490 = scalar_lea.sflag [#allocation6], %s489
          %s491 = sand.u32 %s95, 1
          %s492 = scalar_lea.vmem [#allocation5], %s491
          %s494 = ssub.s32 16, 16
          %495 = vsyncadd %s490, %s494
          %s496 = smul.addr %s54, 16
          %s497 = scalar_lea.hbm %s1, %s496
          %s499 = sshll.u32 %s492, 4
          %s500 = int_to_ptr.vmem [resolvable:$true] %s499
          %502 = dma.hbm_to_vmem [thread:$0]  %s497, 16, %s500, %s490
        $region24: #{bert_forward.1} parent=15 // pred_fallthru
          _
        // Predicated region
        $region25: #{bert_forward.1} parent=15 // pred_check
          %p503 = pneg %p131
        $region26: #{bert_forward.1} parent=15 // pred_check_branch
          %505 = sbr.rel (%p503) target = $region28
        $region27: #{bert_forward.1} parent=15 // pred_region
          %s506 = sand.u32 %s47, 1
          %s507 = scalar_lea.sflag [#allocation6], %s506
          %s508 = sand.u32 %s121, 1
          %s509 = smul.addr %s508, 16
          %s510 = scalar_lea.vmem [#allocation7], %s509
          %s512 = ssub.s32 256, 256
          %513 = vsyncadd %s507, %s512
          %s514 = smul.addr %s55, 4
          %s515 = smul.addr %s514, 64
          %s516 = scalar_lea.hbm %s2, %s515
          %s517 = sshll.u32 %s510, 4
          %s518 = int_to_ptr.vmem [resolvable:$true] %s517
          %523 = dma.hbm_to_vmem [thread:$0]  %s516, 256, %s518, %s507, 64, 64, 4
        $region28: #{bert_forward.1} parent=15 // pred_fallthru
          _
        // Predicated region
        $region29: #{bert_forward.1} parent=15 // pred_check
          %p524 = pneg %p157
        $region30: #{bert_forward.1} parent=15 // pred_check_branch
          %526 = sbr.rel (%p524) target = $region32
        $region31: #{bert_forward.1} parent=15 // pred_region
          %s527 = sand.u32 %s47, 1
          %s528 = scalar_lea.sflag [#allocation9], %s527
          %s529 = sand.u32 %s147, 1
          %s530 = scalar_lea.vmem [#allocation8], %s529
          %s532 = ssub.s32 16, 16
          %533 = vsyncadd %s528, %s532
          %s534 = smul.addr %s55, 16
          %s535 = scalar_lea.hbm %s3, %s534
          %s537 = sshll.u32 %s530, 4
          %s538 = int_to_ptr.vmem [resolvable:$true] %s537
          %540 = dma.hbm_to_vmem [thread:$0]  %s535, 16, %s538, %s528
        $region32: #{bert_forward.1} parent=15 // pred_fallthru
          _
        // Predicated region
        $region33: #{bert_forward.1} parent=15 // pred_check
          %p541 = pneg %p183
        $region34: #{bert_forward.1} parent=15 // pred_check_branch
          %543 = sbr.rel (%p541) target = $region36
        $region35: #{bert_forward.1} parent=15 // pred_region
          %s544 = sand.u32 %s47, 1
          %s545 = scalar_lea.sflag [#allocation9], %s544
          %s546 = sand.u32 %s173, 1
          %s547 = smul.addr %s546, 16
          %s548 = scalar_lea.vmem [#allocation10], %s547
          %s550 = ssub.s32 256, 256
          %551 = vsyncadd %s545, %s550
          %s552 = smul.addr %s55, 4
          %s553 = smul.addr %s552, 64
          %s554 = scalar_lea.hbm %s4, %s553
          %s555 = sshll.u32 %s548, 4
          %s556 = int_to_ptr.vmem [resolvable:$true] %s555
          %561 = dma.hbm_to_vmem [thread:$0]  %s554, 256, %s556, %s545, 64, 64, 4
        $region36: #{bert_forward.1} parent=15 // pred_fallthru
          _
        // Predicated region
        $region37: #{bert_forward.1} parent=15 // pred_check
          %p562 = pneg %p209
        $region38: #{bert_forward.1} parent=15 // pred_check_branch
          %564 = sbr.rel (%p562) target = $region40
        $region39: #{bert_forward.1} parent=15 // pred_region
          %s565 = sand.u32 %s47, 1
          %s566 = scalar_lea.sflag [#allocation12], %s565
          %s567 = sand.u32 %s199, 1
          %s568 = scalar_lea.vmem [#allocation11], %s567
          %s570 = ssub.s32 16, 16
          %571 = vsyncadd %s566, %s570
          %s572 = smul.addr %s55, 16
          %s573 = scalar_lea.hbm %s5, %s572
          %s575 = sshll.u32 %s568, 4
          %s576 = int_to_ptr.vmem [resolvable:$true] %s575
          %578 = dma.hbm_to_vmem [thread:$0]  %s573, 16, %s576, %s566
        $region40: #{bert_forward.1} parent=15 // pred_fallthru
          _
        // Predicated region
        $region41: #{bert_forward.1} parent=15 // pred_check
          %p579 = pneg %p235
        $region42: #{bert_forward.1} parent=15 // pred_check_branch
          %581 = sbr.rel (%p579) target = $region44
        $region43: #{bert_forward.1} parent=15 // pred_region
          %s582 = sand.u32 %s47, 1
          %s583 = scalar_lea.sflag [#allocation12], %s582
          %s584 = sand.u32 %s225, 1
          %s585 = scalar_lea.vmem [#allocation13], %s584
          %s587 = ssub.s32 16, 16
          %588 = vsyncadd %s583, %s587
          %s589 = smul.addr %s55, 16
          %s590 = scalar_lea.hbm %s6, %s589
          %s592 = sshll.u32 %s585, 4
          %s593 = int_to_ptr.vmem [resolvable:$true] %s592
          %595 = dma.hbm_to_vmem [thread:$0]  %s590, 16, %s593, %s583
        $region44: #{bert_forward.1} parent=15 // pred_fallthru
          _
        // Predicated region
        $region45: #{bert_forward.1} parent=15 // pred_check
          %p596 = pneg %p261
        $region46: #{bert_forward.1} parent=15 // pred_check_branch
          %598 = sbr.rel (%p596) target = $region48
        $region47: #{bert_forward.1} parent=15 // pred_region
          %s599 = sand.u32 %s47, 1
          %s600 = scalar_lea.sflag [#allocation15], %s599
          %s601 = sand.u32 %s251, 1
          %s602 = scalar_lea.vmem [#allocation14], %s601
          %s604 = ssub.s32 16, 16
          %605 = vsyncadd %s600, %s604
          %s606 = smul.addr %s55, 16
          %s607 = scalar_lea.hbm %s7, %s606
          %s609 = sshll.u32 %s602, 4
          %s610 = int_to_ptr.vmem [resolvable:$true] %s609
          %612 = dma.hbm_to_vmem [thread:$0]  %s607, 16, %s610, %s600
        $region48: #{bert_forward.1} parent=15 // pred_fallthru
          _
        // Predicated region
        $region49: #{bert_forward.1} parent=15 // pred_check
          %p613 = pneg %p287
        $region50: #{bert_forward.1} parent=15 // pred_check_branch
          %615 = sbr.rel (%p613) target = $region52
        $region51: #{bert_forward.1} parent=15 // pred_region
          %s616 = sand.u32 %s47, 1
          %s617 = scalar_lea.sflag [#allocation15], %s616
          %s618 = sand.u32 %s277, 1
          %s619 = smul.addr %s618, 16
          %s620 = scalar_lea.vmem [#allocation16], %s619
          %s622 = ssub.s32 256, 256
          %623 = vsyncadd %s617, %s622
          %s624 = smul.addr %s55, 4
          %s625 = smul.addr %s624, 64
          %s626 = scalar_lea.hbm %s8, %s625
          %s627 = sshll.u32 %s620, 4
          %s628 = int_to_ptr.vmem [resolvable:$true] %s627
          %633 = dma.hbm_to_vmem [thread:$0]  %s626, 256, %s628, %s617, 64, 64, 4
        $region52: #{bert_forward.1} parent=15 // pred_fallthru
          _
        // Predicated region
        $region53: #{bert_forward.1} parent=15 // pred_check
          %p634 = pneg %p313
        $region54: #{bert_forward.1} parent=15 // pred_check_branch
          %636 = sbr.rel (%p634) target = $region56
        $region55: #{bert_forward.1} parent=15 // pred_region
          %s637 = sand.u32 %s47, 1
          %s638 = scalar_lea.sflag [#allocation18], %s637
          %s639 = sand.u32 %s303, 1
          %s640 = scalar_lea.vmem [#allocation17], %s639
          %s642 = ssub.s32 16, 16
          %643 = vsyncadd %s638, %s642
          %s644 = smul.addr %s55, 16
          %s645 = scalar_lea.hbm %s9, %s644
          %s647 = sshll.u32 %s640, 4
          %s648 = int_to_ptr.vmem [resolvable:$true] %s647
          %650 = dma.hbm_to_vmem [thread:$0]  %s645, 16, %s648, %s638
        $region56: #{bert_forward.1} parent=15 // pred_fallthru
          _
        // Predicated region
        $region57: #{bert_forward.1} parent=15 // pred_check
          %p651 = pneg %p339
        $region58: #{bert_forward.1} parent=15 // pred_check_branch
          %653 = sbr.rel (%p651) target = $region60
        $region59: #{bert_forward.1} parent=15 // pred_region
          %s654 = sand.u32 %s47, 1
          %s655 = scalar_lea.sflag [#allocation18], %s654
          %s656 = sand.u32 %s329, 1
          %s657 = smul.addr %s656, 32
          %s658 = scalar_lea.vmem [#allocation19], %s657
          %s660 = ssub.s32 512, 512
          %661 = vsyncadd %s655, %s660
          %s662 = smul.addr %s55, 8
          %s663 = smul.addr %s662, 64
          %s664 = scalar_lea.hbm %s10, %s663
          %s665 = sshll.u32 %s658, 4
          %s666 = int_to_ptr.vmem [resolvable:$true] %s665
          %671 = dma.hbm_to_vmem [thread:$0]  %s664, 512, %s666, %s655, 64, 64, 4
        $region60: #{bert_forward.1} parent=15 // pred_fallthru
          _
        // Predicated region
        $region61: #{bert_forward.1} parent=15 // pred_check
          %p672 = pneg %p365
        $region62: #{bert_forward.1} parent=15 // pred_check_branch
          %674 = sbr.rel (%p672) target = $region64
        $region63: #{bert_forward.1} parent=15 // pred_region
          %s675 = sand.u32 %s47, 1
          %s676 = scalar_lea.sflag [#allocation21], %s675
          %s677 = sand.u32 %s355, 1
          %s678 = scalar_lea.vmem [#allocation20], %s677
          %s680 = ssub.s32 16, 16
          %681 = vsyncadd %s676, %s680
          %s682 = smul.addr %s55, 16
          %s683 = scalar_lea.hbm %s11, %s682
          %s685 = sshll.u32 %s678, 4
          %s686 = int_to_ptr.vmem [resolvable:$true] %s685
          %688 = dma.hbm_to_vmem [thread:$0]  %s683, 16, %s686, %s676
        $region64: #{bert_forward.1} parent=15 // pred_fallthru
          _
        // Predicated region
        $region65: #{bert_forward.1} parent=15 // pred_check
          %p689 = pneg %p391
        $region66: #{bert_forward.1} parent=15 // pred_check_branch
          %691 = sbr.rel (%p689) target = $region68
        $region67: #{bert_forward.1} parent=15 // pred_region
          %s692 = sand.u32 %s47, 1
          %s693 = scalar_lea.sflag [#allocation21], %s692
          %s694 = sand.u32 %s381, 1
          %s695 = scalar_lea.vmem [#allocation22], %s694
          %s697 = ssub.s32 16, 16
          %698 = vsyncadd %s693, %s697
          %s699 = smul.addr %s55, 16
          %s700 = scalar_lea.hbm %s12, %s699
          %s702 = sshll.u32 %s695, 4
          %s703 = int_to_ptr.vmem [resolvable:$true] %s702
          %705 = dma.hbm_to_vmem [thread:$0]  %s700, 16, %s703, %s693
        $region68: #{bert_forward.1} parent=15 // pred_fallthru
          _
        // Predicated region
        $region69: #{bert_forward.1} parent=15 // pred_check
          %p706 = pneg %p417
        $region70: #{bert_forward.1} parent=15 // pred_check_branch
          %708 = sbr.rel (%p706) target = $region72
        $region71: #{bert_forward.1} parent=15 // pred_region
          %s709 = sand.u32 %s407, 1
          %s710 = scalar_lea.sflag [#allocation24], %s709
          %s711 = sand.u32 %s407, 1
          %s712 = scalar_lea.vmem [#allocation23], %s711
          %s714 = ssub.s32 16, 16
          %715 = vsyncadd %s710, %s714
          %s716 = smul.addr %s55, 16
          %s717 = scalar_lea.hbm %s13, %s716
          %s719 = sshll.u32 %s712, 4
          %s720 = int_to_ptr.vmem [resolvable:$true] %s719
          %722 = dma.hbm_to_vmem [thread:$0]  %s717, 16, %s720, %s710
        $region72: #{bert_forward.1} parent=15 // pred_fallthru
          _
      $region16: #{bert_forward.1} parent=5 // pred_fallthru
        _
      %p723 = scmp.le.s32.totalorder 1, %s47
      %p724 = scmp.lt.s32.totalorder %s47, 5
      %p725 = pnand %p723, %p724
      %p726 = pneg %p725
      // Predicated region
      $region73: #{bert_forward.1} parent=5 // pred_check
        _
      $region74: #{bert_forward.1} parent=5 // pred_check_branch
        %728 = sbr.rel (%p725) target = $region76
      $region75: #{bert_forward.1} parent=5 // pred_region
        %s729 = ssub.s32 %s47, 1
        %s730 = sand.u32 %s72, 1
        %s731 = scalar_lea.sflag [#allocation3], %s730
        %s732 = sand.u32 %s72, 1
        %s733 = smul.addr %s732, 8
        %s734 = scalar_lea.vmem [#allocation2], %s733
        // Predicated region
        $region77: #{bert_forward.1} parent=75 // pred_check
          %p735 = pneg %p85
        $region78: #{bert_forward.1} parent=75 // pred_check_branch
          %737 = sbr.rel (%p735) target = $region80
        $region79: #{bert_forward.1} parent=75 // pred_region
          %738 = dma.done %s731, 128
        $region80: #{bert_forward.1} parent=75 // pred_fallthru
          _
        %s739 = sand.u32 %s52, 1
        %s740 = scalar_lea.sflag [#allocation6], %s739
        %s741 = sand.u32 %s98, 1
        %s742 = scalar_lea.vmem [#allocation5], %s741
        // Predicated region
        $region81: #{bert_forward.1} parent=75 // pred_check
          %p743 = pneg %p111
        $region82: #{bert_forward.1} parent=75 // pred_check_branch
          %745 = sbr.rel (%p743) target = $region84
        $region83: #{bert_forward.1} parent=75 // pred_region
          %746 = dma.done %s740, 16
        $region84: #{bert_forward.1} parent=75 // pred_fallthru
          _
        %s747 = sand.u32 %s52, 1
        %s748 = scalar_lea.sflag [#allocation6], %s747
        %s749 = sand.u32 %s124, 1
        %s750 = smul.addr %s749, 16
        %s751 = scalar_lea.vmem [#allocation7], %s750
        // Predicated region
        $region85: #{bert_forward.1} parent=75 // pred_check
          %p752 = pneg %p137
        $region86: #{bert_forward.1} parent=75 // pred_check_branch
          %754 = sbr.rel (%p752) target = $region88
        $region87: #{bert_forward.1} parent=75 // pred_region
          %755 = dma.done %s748, 256
        $region88: #{bert_forward.1} parent=75 // pred_fallthru
          _
        %s756 = sand.u32 %s52, 1
        %s757 = scalar_lea.sflag [#allocation9], %s756
        %s758 = sand.u32 %s150, 1
        %s759 = scalar_lea.vmem [#allocation8], %s758
        // Predicated region
        $region89: #{bert_forward.1} parent=75 // pred_check
          %p760 = pneg %p163
        $region90: #{bert_forward.1} parent=75 // pred_check_branch
          %762 = sbr.rel (%p760) target = $region92
        $region91: #{bert_forward.1} parent=75 // pred_region
          %763 = dma.done %s757, 16
        $region92: #{bert_forward.1} parent=75 // pred_fallthru
          _
        %s764 = sand.u32 %s52, 1
        %s765 = scalar_lea.sflag [#allocation9], %s764
        %s766 = sand.u32 %s176, 1
        %s767 = smul.addr %s766, 16
        %s768 = scalar_lea.vmem [#allocation10], %s767
        // Predicated region
        $region93: #{bert_forward.1} parent=75 // pred_check
          %p769 = pneg %p189
        $region94: #{bert_forward.1} parent=75 // pred_check_branch
          %771 = sbr.rel (%p769) target = $region96
        $region95: #{bert_forward.1} parent=75 // pred_region
          %772 = dma.done %s765, 256
        $region96: #{bert_forward.1} parent=75 // pred_fallthru
          _
        %s773 = sand.u32 %s52, 1
        %s774 = scalar_lea.sflag [#allocation12], %s773
        %s775 = sand.u32 %s202, 1
        %s776 = scalar_lea.vmem [#allocation11], %s775
        // Predicated region
        $region97: #{bert_forward.1} parent=75 // pred_check
          %p777 = pneg %p215
        $region98: #{bert_forward.1} parent=75 // pred_check_branch
          %779 = sbr.rel (%p777) target = $region100
        $region99: #{bert_forward.1} parent=75 // pred_region
          %780 = dma.done %s774, 16
        $region100: #{bert_forward.1} parent=75 // pred_fallthru
          _
        %s781 = sand.u32 %s52, 1
        %s782 = scalar_lea.sflag [#allocation12], %s781
        %s783 = sand.u32 %s228, 1
        %s784 = scalar_lea.vmem [#allocation13], %s783
        // Predicated region
        $region101: #{bert_forward.1} parent=75 // pred_check
          %p785 = pneg %p241
        $region102: #{bert_forward.1} parent=75 // pred_check_branch
          %787 = sbr.rel (%p785) target = $region104
        $region103: #{bert_forward.1} parent=75 // pred_region
          %788 = dma.done %s782, 16
        $region104: #{bert_forward.1} parent=75 // pred_fallthru
          _
        %s789 = sand.u32 %s52, 1
        %s790 = scalar_lea.sflag [#allocation15], %s789
        %s791 = sand.u32 %s254, 1
        %s792 = scalar_lea.vmem [#allocation14], %s791
        // Predicated region
        $region105: #{bert_forward.1} parent=75 // pred_check
          %p793 = pneg %p267
        $region106: #{bert_forward.1} parent=75 // pred_check_branch
          %795 = sbr.rel (%p793) target = $region108
        $region107: #{bert_forward.1} parent=75 // pred_region
          %796 = dma.done %s790, 16
        $region108: #{bert_forward.1} parent=75 // pred_fallthru
          _
        %s797 = sand.u32 %s52, 1
        %s798 = scalar_lea.sflag [#allocation15], %s797
        %s799 = sand.u32 %s280, 1
        %s800 = smul.addr %s799, 16
        %s801 = scalar_lea.vmem [#allocation16], %s800
        // Predicated region
        $region109: #{bert_forward.1} parent=75 // pred_check
          %p802 = pneg %p293
        $region110: #{bert_forward.1} parent=75 // pred_check_branch
          %804 = sbr.rel (%p802) target = $region112
        $region111: #{bert_forward.1} parent=75 // pred_region
          %805 = dma.done %s798, 256
        $region112: #{bert_forward.1} parent=75 // pred_fallthru
          _
        %s806 = sand.u32 %s52, 1
        %s807 = scalar_lea.sflag [#allocation18], %s806
        %s808 = sand.u32 %s306, 1
        %s809 = scalar_lea.vmem [#allocation17], %s808
        // Predicated region
        $region113: #{bert_forward.1} parent=75 // pred_check
          %p810 = pneg %p319
        $region114: #{bert_forward.1} parent=75 // pred_check_branch
          %812 = sbr.rel (%p810) target = $region116
        $region115: #{bert_forward.1} parent=75 // pred_region
          %813 = dma.done %s807, 16
        $region116: #{bert_forward.1} parent=75 // pred_fallthru
          _
        %s814 = sand.u32 %s52, 1
        %s815 = scalar_lea.sflag [#allocation18], %s814
        %s816 = sand.u32 %s332, 1
        %s817 = smul.addr %s816, 32
        %s818 = scalar_lea.vmem [#allocation19], %s817
        // Predicated region
        $region117: #{bert_forward.1} parent=75 // pred_check
          %p819 = pneg %p345
        $region118: #{bert_forward.1} parent=75 // pred_check_branch
          %821 = sbr.rel (%p819) target = $region120
        $region119: #{bert_forward.1} parent=75 // pred_region
          %822 = dma.done %s815, 512
        $region120: #{bert_forward.1} parent=75 // pred_fallthru
          _
        %s823 = sand.u32 %s52, 1
        %s824 = scalar_lea.sflag [#allocation21], %s823
        %s825 = sand.u32 %s358, 1
        %s826 = scalar_lea.vmem [#allocation20], %s825
        // Predicated region
        $region121: #{bert_forward.1} parent=75 // pred_check
          %p827 = pneg %p371
        $region122: #{bert_forward.1} parent=75 // pred_check_branch
          %829 = sbr.rel (%p827) target = $region124
        $region123: #{bert_forward.1} parent=75 // pred_region
          %830 = dma.done %s824, 16
        $region124: #{bert_forward.1} parent=75 // pred_fallthru
          _
        %s831 = sand.u32 %s52, 1
        %s832 = scalar_lea.sflag [#allocation21], %s831
        %s833 = sand.u32 %s384, 1
        %s834 = scalar_lea.vmem [#allocation22], %s833
        // Predicated region
        $region125: #{bert_forward.1} parent=75 // pred_check
          %p835 = pneg %p397
        $region126: #{bert_forward.1} parent=75 // pred_check_branch
          %837 = sbr.rel (%p835) target = $region128
        $region127: #{bert_forward.1} parent=75 // pred_region
          %838 = dma.done %s832, 16
        $region128: #{bert_forward.1} parent=75 // pred_fallthru
          _
        %s839 = sand.u32 %s410, 1
        %s840 = scalar_lea.sflag [#allocation24], %s839
        %s841 = sand.u32 %s410, 1
        %s842 = scalar_lea.vmem [#allocation23], %s841
        // Predicated region
        $region129: #{bert_forward.1} parent=75 // pred_check
          %p843 = pneg %p423
        $region130: #{bert_forward.1} parent=75 // pred_check_branch
          %845 = sbr.rel (%p843) target = $region132
        $region131: #{bert_forward.1} parent=75 // pred_region
          %846 = dma.done %s840, 16
        $region132: #{bert_forward.1} parent=75 // pred_fallthru
          _
        %s847 = sand.u32 %s72, 1
        %s848 = scalar_lea.sflag [#allocation3], %s847
        %s849 = sand.u32 %s72, 1
        %s850 = smul.addr %s849, 8
        %s851 = scalar_lea.vmem [#allocation2], %s850
        %p852 = pneg %p85
        %p853 = pneg %p82
        %s854 = sand.u32 %s52, 1
        %s855 = scalar_lea.sflag [#allocation6], %s854
        %s856 = sand.u32 %s98, 1
        %s857 = scalar_lea.vmem [#allocation5], %s856
        %p858 = pneg %p111
        %p859 = pneg %p108
        %s860 = sand.u32 %s52, 1
        %s861 = scalar_lea.sflag [#allocation6], %s860
        %s862 = sand.u32 %s124, 1
        %s863 = smul.addr %s862, 16
        %s864 = scalar_lea.vmem [#allocation7], %s863
        %p865 = pneg %p137
        %p866 = pneg %p134
        %s867 = sand.u32 %s52, 1
        %s868 = scalar_lea.sflag [#allocation9], %s867
        %s869 = sand.u32 %s150, 1
        %s870 = scalar_lea.vmem [#allocation8], %s869
        %p871 = pneg %p163
        %p872 = pneg %p160
        %s873 = sand.u32 %s52, 1
        %s874 = scalar_lea.sflag [#allocation9], %s873
        %s875 = sand.u32 %s176, 1
        %s876 = smul.addr %s875, 16
        %s877 = scalar_lea.vmem [#allocation10], %s876
        %p878 = pneg %p189
        %p879 = pneg %p186
        %s880 = sand.u32 %s52, 1
        %s881 = scalar_lea.sflag [#allocation12], %s880
        %s882 = sand.u32 %s202, 1
        %s883 = scalar_lea.vmem [#allocation11], %s882
        %p884 = pneg %p215
        %p885 = pneg %p212
        %s886 = sand.u32 %s52, 1
        %s887 = scalar_lea.sflag [#allocation12], %s886
        %s888 = sand.u32 %s228, 1
        %s889 = scalar_lea.vmem [#allocation13], %s888
        %p890 = pneg %p241
        %p891 = pneg %p238
        %s892 = sand.u32 %s52, 1
        %s893 = scalar_lea.sflag [#allocation15], %s892
        %s894 = sand.u32 %s254, 1
        %s895 = scalar_lea.vmem [#allocation14], %s894
        %p896 = pneg %p267
        %p897 = pneg %p264
        %s898 = sand.u32 %s52, 1
        %s899 = scalar_lea.sflag [#allocation15], %s898
        %s900 = sand.u32 %s280, 1
        %s901 = smul.addr %s900, 16
        %s902 = scalar_lea.vmem [#allocation16], %s901
        %p903 = pneg %p293
        %p904 = pneg %p290
        %s905 = sand.u32 %s52, 1
        %s906 = scalar_lea.sflag [#allocation18], %s905
        %s907 = sand.u32 %s306, 1
        %s908 = scalar_lea.vmem [#allocation17], %s907
        %p909 = pneg %p319
        %p910 = pneg %p316
        %s911 = sand.u32 %s52, 1
        %s912 = scalar_lea.sflag [#allocation18], %s911
        %s913 = sand.u32 %s332, 1
        %s914 = smul.addr %s913, 32
        %s915 = scalar_lea.vmem [#allocation19], %s914
        %p916 = pneg %p345
        %p917 = pneg %p342
        %s918 = sand.u32 %s52, 1
        %s919 = scalar_lea.sflag [#allocation21], %s918
        %s920 = sand.u32 %s358, 1
        %s921 = scalar_lea.vmem [#allocation20], %s920
        %p922 = pneg %p371
        %p923 = pneg %p368
        %s924 = sand.u32 %s52, 1
        %s925 = scalar_lea.sflag [#allocation21], %s924
        %s926 = sand.u32 %s384, 1
        %s927 = scalar_lea.vmem [#allocation22], %s926
        %p928 = pneg %p397
        %p929 = pneg %p394
        %s930 = sand.u32 %s410, 1
        %s931 = scalar_lea.sflag [#allocation24], %s930
        %s932 = sand.u32 %s410, 1
        %s933 = scalar_lea.vmem [#allocation23], %s932
        %p934 = pneg %p423
        %p935 = pneg %p420
        %p936 = pneg %p449
        %p937 = pneg %p446
        %s938 = sand.u32 %s436, 1
        %s939 = scalar_lea.sflag [#allocation4], %s938
        %s940 = sand.u32 %s436, 1
        %s941 = smul.addr %s940, 8
        %s942 = scalar_lea.vmem [#allocation25], %s941
        %p944 = scmp.eq.s32.totalorder %s57, 0
        // Predicated region
        $region133: #{bert_forward.1} parent=75 // pred_check
          %p945 = pneg %p944
        $region134: #{bert_forward.1} parent=75 // pred_check_branch
          %947 = sbr.rel (%p945) target = $region136
        $region135: #{bert_forward.1} parent=75 // pred_region
          %v948 = vld [vmem:[%s734] sm:$0xff]
          %vm949 = vcmask 261120
          %950 = vst.msk [vmem:[%s942] sm:$0xff] %vm949, %v948
        $region136: #{bert_forward.1} parent=75 // pred_fallthru
          _
        %v951 = vld [vmem:[%s942] sm:$0xff]
        %v952 = vpack.c.bf16 %v951, %v951
        %v953 = vld [vmem:[%s751] sm:$0xf]
        %v954 = vld [vmem:[%s751 + $0x4] sm:$0xf]
        %v955 = vld [vmem:[%s751 + $0x8] sm:$0xf]
        %v956 = vld [vmem:[%s751 + $0xc] sm:$0xf]
        %v957 = vld [vmem:[%s759] sm:$0x1]
        %v959 = vlaneseq
        %v960 = vshrl.u32 %v959, 7
        %v961 = vsub.s32 0, %v960
        %v962 = vrot.slane %v957, %v961
        %v968 = vunpack.c.l.b16 %v953
        %v969 = vunpack.c.l.b16 %v954
        %v970 = vunpack.c.l.b16 %v955
        %v971 = vunpack.c.l.b16 %v956
        %v972 = vpack.c.b16 %v969, %v968
        %v973 = vpack.c.b16 %v971, %v970
        %vm976 = vcmask 261120
        %v978 = vsel %vm976, %v952, 0
        %980 = vmatprep.subr.bf16.mxu0 0
        %981 = vmatpush1.bf16.msra.mxu0 %v972
        %982 = vmatprep.subr.bf16.mxu0 0
        %983 = vmatpush1.bf16.msra.mxu0 %v973
        %984 = vmatprep.subr.bf16.mxu0 0
        %985 = vmatpush1.bf16.msra.mxu0 0
        %986 = vmatprep.subr.bf16.mxu0 0
        %987 = vmatpush1.bf16.msra.mxu0 0
        %988 = vmatprep.subr.bf16.mxu0 0
        %989 = vmatpush1.bf16.msra.mxu0 0
        %990 = vmatprep.subr.bf16.mxu0 0
        %991 = vmatpush1.bf16.msra.mxu0 0
        %992 = vmatprep.subr.bf16.mxu0 0
        %993 = vmatpush1.bf16.msra.mxu0 0
        %994 = vmatprep.subr.bf16.mxu0 0
        %995 = vmatpush1.bf16.msra.mxu0 0
        %996 = vmatprep.subr.bf16.mxu0 0
        %997 = vmatpush1.bf16.msra.mxu0 0
        %998 = vmatprep.subr.bf16.mxu0 0
        %999 = vmatpush1.bf16.msra.mxu0 0
        %1000 = vmatprep.subr.bf16.mxu0 0
        %1001 = vmatpush1.bf16.msra.mxu0 0
        %1002 = vmatprep.subr.bf16.mxu0 0
        %1003 = vmatpush1.bf16.msra.mxu0 0
        %1004 = vmatprep.subr.bf16.mxu0 0
        %1005 = vmatpush1.bf16.msra.mxu0 0
        %1006 = vmatprep.subr.bf16.mxu0 0
        %1007 = vmatpush1.bf16.msra.mxu0 0
        %1008 = vmatprep.subr.bf16.mxu0 0
        %1009 = vmatpush1.bf16.msra.mxu0 0
        %1010 = vmatprep.subr.bf16.mxu0 0
        %1011 = vmatpush1.bf16.msra.mxu0 0
        %1012 = vmatprep.mubr.bf16.mxu0 0
        %1013 = vmatmul.mubr.bf16.gmra.mrb[0].mxu0 %v978
        %v1014 = vpop.f32.mrb[0].mxu0
        %v1015 = vadd.f32 %v962, %v1014
        %v1016 = vpop.f32.mrb[0].mxu0
        %v1017 = vpop.f32.mrb[0].mxu0
        %v1018 = vpop.f32.mrb[0].mxu0
        %1019 = vdwg.mxu0
        %1021 = vrot.lane.b32.xlu0 %v1015, 120
        %v1022 = vpop.permute.xlu0 %1021
        %1024 = vrot.lane.b32.xlu0 %v1015, 112
        %v1025 = vpop.permute.xlu0 %1024
        %1027 = vrot.lane.b32.xlu0 %v1015, 104
        %v1028 = vpop.permute.xlu0 %1027
        %v1030 = vpack.c.bf16 %v1015, %v1015
        %v1031 = vpack.c.bf16 %v1022, %v1022
        %v1032 = vpack.c.bf16 %v1025, %v1025
        %v1033 = vpack.c.bf16 %v1028, %v1028
        %v1034 = vld [vmem:[%s742] sm:$0x1]
        %v1036 = vlaneseq
        %v1037 = vshrl.u32 %v1036, 7
        %v1038 = vsub.s32 0, %v1037
        %v1039 = vrot.slane %v1034, %v1038
        %1042 = vrot.lane.b32.xlu0 %v1030, 96
        %v1043 = vpop.permute.xlu0 %1042
        %vm1044 = vcmask 64512
        %v1046 = vsel %vm1044, %v1030, 0
        %v1049 = vsel %vm1044, %v1043, 0
        %1051 = vmatprep.subr.bf16.mxu0 0
        %1052 = vmatpush1.bf16.xpose.msra.mxu0 %v1049
        %1053 = vmatprep.subr.bf16.mxu0 0
        %1054 = vmatpush1.bf16.xpose.msra.mxu0 0
        %1055 = vmatprep.subr.bf16.mxu0 0
        %1056 = vmatpush1.bf16.xpose.msra.mxu0 0
        %1057 = vmatprep.subr.bf16.mxu0 0
        %1058 = vmatpush1.bf16.xpose.msra.mxu0 0
        %1059 = vmatprep.subr.bf16.mxu0 0
        %1060 = vmatpush1.bf16.xpose.msra.mxu0 0
        %1061 = vmatprep.subr.bf16.mxu0 0
        %1062 = vmatpush1.bf16.xpose.msra.mxu0 0
        %1063 = vmatprep.subr.bf16.mxu0 0
        %1064 = vmatpush1.bf16.xpose.msra.mxu0 0
        %1065 = vmatprep.subr.bf16.mxu0 0
        %1066 = vmatpush1.bf16.xpose.msra.mxu0 0
        %1067 = vmatprep.subr.bf16.mxu0 0
        %1068 = vmatpush1.bf16.xpose.msra.mxu0 0
        %1069 = vmatprep.subr.bf16.mxu0 0
        %1070 = vmatpush1.bf16.xpose.msra.mxu0 0
        %1071 = vmatprep.subr.bf16.mxu0 0
        %1072 = vmatpush1.bf16.xpose.msra.mxu0 0
        %1073 = vmatprep.subr.bf16.mxu0 0
        %1074 = vmatpush1.bf16.xpose.msra.mxu0 0
        %1075 = vmatprep.subr.bf16.mxu0 0
        %1076 = vmatpush1.bf16.xpose.msra.mxu0 0
        %1077 = vmatprep.subr.bf16.mxu0 0
        %1078 = vmatpush1.bf16.xpose.msra.mxu0 0
        %1079 = vmatprep.subr.bf16.mxu0 0
        %1080 = vmatpush1.bf16.xpose.msra.mxu0 0
        %1081 = vmatprep.subr.bf16.mxu0 0
        %1082 = vmatpush1.bf16.xpose.msra.mxu0 0
        %1083 = vmatprep.mubr.bf16.mxu0 0
        %1084 = vmatmul.mubr.bf16.gmra.mrb[0].mxu0 %v1046
        %v1085 = vpop.f32.mrb[0].mxu0
        %v1086 = vadd.f32 %v1039, %v1085
        %v1087 = vpop.f32.mrb[0].mxu0
        %v1088 = vpop.f32.mrb[0].mxu0
        %v1089 = vpop.f32.mrb[0].mxu0
        %1090 = vdwg.mxu0
        %1092 = vrot.lane.b32.xlu0 %v1031, 96
        %v1093 = vpop.permute.xlu0 %1092
        %v1095 = vsel %vm1044, %v1031, 0
        %v1098 = vsel %vm1044, %v1093, 0
        %1100 = vmatprep.subr.bf16.mxu0 0
        %1101 = vmatpush1.bf16.xpose.msra.mxu0 %v1098
        %1102 = vmatprep.subr.bf16.mxu0 0
        %1103 = vmatpush1.bf16.xpose.msra.mxu0 0
        %1104 = vmatprep.subr.bf16.mxu0 0
        %1105 = vmatpush1.bf16.xpose.msra.mxu0 0
        %1106 = vmatprep.subr.bf16.mxu0 0
        %1107 = vmatpush1.bf16.xpose.msra.mxu0 0
        %1108 = vmatprep.subr.bf16.mxu0 0
        %1109 = vmatpush1.bf16.xpose.msra.mxu0 0
        %1110 = vmatprep.subr.bf16.mxu0 0
        %1111 = vmatpush1.bf16.xpose.msra.mxu0 0
        %1112 = vmatprep.subr.bf16.mxu0 0
        %1113 = vmatpush1.bf16.xpose.msra.mxu0 0
        %1114 = vmatprep.subr.bf16.mxu0 0
        %1115 = vmatpush1.bf16.xpose.msra.mxu0 0
        %1116 = vmatprep.subr.bf16.mxu0 0
        %1117 = vmatpush1.bf16.xpose.msra.mxu0 0
        %1118 = vmatprep.subr.bf16.mxu0 0
        %1119 = vmatpush1.bf16.xpose.msra.mxu0 0
        %1120 = vmatprep.subr.bf16.mxu0 0
        %1121 = vmatpush1.bf16.xpose.msra.mxu0 0
        %1122 = vmatprep.subr.bf16.mxu0 0
        %1123 = vmatpush1.bf16.xpose.msra.mxu0 0
        %1124 = vmatprep.subr.bf16.mxu0 0
        %1125 = vmatpush1.bf16.xpose.msra.mxu0 0
        %1126 = vmatprep.subr.bf16.mxu0 0
        %1127 = vmatpush1.bf16.xpose.msra.mxu0 0
        %1128 = vmatprep.subr.bf16.mxu0 0
        %1129 = vmatpush1.bf16.xpose.msra.mxu0 0
        %1130 = vmatprep.subr.bf16.mxu0 0
        %1131 = vmatpush1.bf16.xpose.msra.mxu0 0
        %1132 = vmatprep.mubr.bf16.mxu0 0
        %1133 = vmatmul.mubr.bf16.gmra.mrb[0].mxu0 %v1095
        %v1134 = vpop.f32.mrb[0].mxu0
        %v1135 = vadd.f32 %v1039, %v1134
        %v1136 = vpop.f32.mrb[0].mxu0
        %v1137 = vpop.f32.mrb[0].mxu0
        %v1138 = vpop.f32.mrb[0].mxu0
        %1139 = vdwg.mxu0
        %1141 = vrot.lane.b32.xlu0 %v1032, 96
        %v1142 = vpop.permute.xlu0 %1141
        %v1144 = vsel %vm1044, %v1032, 0
        %v1147 = vsel %vm1044, %v1142, 0
        %1149 = vmatprep.subr.bf16.mxu0 0
        %1150 = vmatpush1.bf16.xpose.msra.mxu0 %v1147
        %1151 = vmatprep.subr.bf16.mxu0 0
        %1152 = vmatpush1.bf16.xpose.msra.mxu0 0
        %1153 = vmatprep.subr.bf16.mxu0 0
        %1154 = vmatpush1.bf16.xpose.msra.mxu0 0
        %1155 = vmatprep.subr.bf16.mxu0 0
        %1156 = vmatpush1.bf16.xpose.msra.mxu0 0
        %1157 = vmatprep.subr.bf16.mxu0 0
        %1158 = vmatpush1.bf16.xpose.msra.mxu0 0
        %1159 = vmatprep.subr.bf16.mxu0 0
        %1160 = vmatpush1.bf16.xpose.msra.mxu0 0
        %1161 = vmatprep.subr.bf16.mxu0 0
        %1162 = vmatpush1.bf16.xpose.msra.mxu0 0
        %1163 = vmatprep.subr.bf16.mxu0 0
        %1164 = vmatpush1.bf16.xpose.msra.mxu0 0
        %1165 = vmatprep.subr.bf16.mxu0 0
        %1166 = vmatpush1.bf16.xpose.msra.mxu0 0
        %1167 = vmatprep.subr.bf16.mxu0 0
        %1168 = vmatpush1.bf16.xpose.msra.mxu0 0
        %1169 = vmatprep.subr.bf16.mxu0 0
        %1170 = vmatpush1.bf16.xpose.msra.mxu0 0
        %1171 = vmatprep.subr.bf16.mxu0 0
        %1172 = vmatpush1.bf16.xpose.msra.mxu0 0
        %1173 = vmatprep.subr.bf16.mxu0 0
        %1174 = vmatpush1.bf16.xpose.msra.mxu0 0
        %1175 = vmatprep.subr.bf16.mxu0 0
        %1176 = vmatpush1.bf16.xpose.msra.mxu0 0
        %1177 = vmatprep.subr.bf16.mxu0 0
        %1178 = vmatpush1.bf16.xpose.msra.mxu0 0
        %1179 = vmatprep.subr.bf16.mxu0 0
        %1180 = vmatpush1.bf16.xpose.msra.mxu0 0
        %1181 = vmatprep.mubr.bf16.mxu0 0
        %1182 = vmatmul.mubr.bf16.gmra.mrb[0].mxu0 %v1144
        %v1183 = vpop.f32.mrb[0].mxu0
        %v1184 = vadd.f32 %v1039, %v1183
        %v1185 = vpop.f32.mrb[0].mxu0
        %v1186 = vpop.f32.mrb[0].mxu0
        %v1187 = vpop.f32.mrb[0].mxu0
        %1188 = vdwg.mxu0
        %1190 = vrot.lane.b32.xlu0 %v1033, 96
        %v1191 = vpop.permute.xlu0 %1190
        %v1193 = vsel %vm1044, %v1033, 0
        %v1196 = vsel %vm1044, %v1191, 0
        %1198 = vmatprep.subr.bf16.mxu0 0
        %1199 = vmatpush1.bf16.xpose.msra.mxu0 %v1196
        %1200 = vmatprep.subr.bf16.mxu0 0
        %1201 = vmatpush1.bf16.xpose.msra.mxu0 0
        %1202 = vmatprep.subr.bf16.mxu0 0
        %1203 = vmatpush1.bf16.xpose.msra.mxu0 0
        %1204 = vmatprep.subr.bf16.mxu0 0
        %1205 = vmatpush1.bf16.xpose.msra.mxu0 0
        %1206 = vmatprep.subr.bf16.mxu0 0
        %1207 = vmatpush1.bf16.xpose.msra.mxu0 0
        %1208 = vmatprep.subr.bf16.mxu0 0
        %1209 = vmatpush1.bf16.xpose.msra.mxu0 0
        %1210 = vmatprep.subr.bf16.mxu0 0
        %1211 = vmatpush1.bf16.xpose.msra.mxu0 0
        %1212 = vmatprep.subr.bf16.mxu0 0
        %1213 = vmatpush1.bf16.xpose.msra.mxu0 0
        %1214 = vmatprep.subr.bf16.mxu0 0
        %1215 = vmatpush1.bf16.xpose.msra.mxu0 0
        %1216 = vmatprep.subr.bf16.mxu0 0
        %1217 = vmatpush1.bf16.xpose.msra.mxu0 0
        %1218 = vmatprep.subr.bf16.mxu0 0
        %1219 = vmatpush1.bf16.xpose.msra.mxu0 0
        %1220 = vmatprep.subr.bf16.mxu0 0
        %1221 = vmatpush1.bf16.xpose.msra.mxu0 0
        %1222 = vmatprep.subr.bf16.mxu0 0
        %1223 = vmatpush1.bf16.xpose.msra.mxu0 0
        %1224 = vmatprep.subr.bf16.mxu0 0
        %1225 = vmatpush1.bf16.xpose.msra.mxu0 0
        %1226 = vmatprep.subr.bf16.mxu0 0
        %1227 = vmatpush1.bf16.xpose.msra.mxu0 0
        %1228 = vmatprep.subr.bf16.mxu0 0
        %1229 = vmatpush1.bf16.xpose.msra.mxu0 0
        %1230 = vmatprep.mubr.bf16.mxu0 0
        %1231 = vmatmul.mubr.bf16.gmra.mrb[0].mxu0 %v1193
        %v1232 = vpop.f32.mrb[0].mxu0
        %v1233 = vadd.f32 %v1039, %v1232
        %v1234 = vpop.f32.mrb[0].mxu0
        %v1235 = vpop.f32.mrb[0].mxu0
        %v1236 = vpop.f32.mrb[0].mxu0
        %1237 = vdwg.mxu0
        %v1238 = vsel %vm1044, %v1086, -inf
        %1239 = vmax.xlane.f32.xlu0 %v1238
        %v1240 = vpop.xlane.xlu0 %1239
        %v1241 = vsel %vm1044, %v1135, -inf
        %1242 = vmax.xlane.f32.xlu0 %v1241
        %v1243 = vpop.xlane.xlu0 %1242
        %v1244 = vsel %vm1044, %v1184, -inf
        %1245 = vmax.xlane.f32.xlu0 %v1244
        %v1246 = vpop.xlane.xlu0 %1245
        %v1247 = vsel %vm1044, %v1233, -inf
        %1248 = vmax.xlane.f32.xlu0 %v1247
        %v1249 = vpop.xlane.xlu0 %1248
        %v1250 = vsub.f32 %v1086, %v1240
        %v1251 = vsub.f32 %v1135, %v1243
        %v1252 = vsub.f32 %v1184, %v1246
        %v1253 = vsub.f32 %v1233, %v1249
        %v1254 = vmul.f32 %v1250, 1.442695
        %v1255 = vpow.pop %v1254
        %v1256 = vmul.f32 %v1251, 1.442695
        %v1257 = vpow.pop %v1256
        %v1258 = vmul.f32 %v1252, 1.442695
        %v1259 = vpow.pop %v1258
        %v1260 = vmul.f32 %v1253, 1.442695
        %v1261 = vpow.pop %v1260
        %v1262 = vsel %vm1044, %v1255, 0.0
        %1263 = vadd.xlane.f32.xlu0 %v1262
        %v1264 = vpop.xlane.xlu0 %1263
        %v1265 = vsel %vm1044, %v1257, 0.0
        %1266 = vadd.xlane.f32.xlu0 %v1265
        %v1267 = vpop.xlane.xlu0 %1266
        %v1268 = vsel %vm1044, %v1259, 0.0
        %1269 = vadd.xlane.f32.xlu0 %v1268
        %v1270 = vpop.xlane.xlu0 %1269
        %v1271 = vsel %vm1044, %v1261, 0.0
        %1272 = vadd.xlane.f32.xlu0 %v1271
        %v1273 = vpop.xlane.xlu0 %1272
        %v1274 = vrcp.pop %v1264
        %v1275 = vrcp.pop %v1267
        %v1276 = vrcp.pop %v1270
        %v1277 = vrcp.pop %v1273
        %v1278 = vmul.f32 %v1255, %v1274
        %v1279 = vmul.f32 %v1257, %v1275
        %v1280 = vmul.f32 %v1259, %v1276
        %v1281 = vmul.f32 %v1261, %v1277
        %v1282 = vpack.c.bf16 %v1278, %v1278
        %v1283 = vpack.c.bf16 %v1279, %v1279
        %v1284 = vpack.c.bf16 %v1280, %v1280
        %v1285 = vpack.c.bf16 %v1281, %v1281
        %1286 = vrot.lane.b32.xlu0 %v1030, 64
        %v1287 = vpop.permute.xlu0 %1286
        %v1289 = vsel %vm1044, %v1282, 0
        %vm1291 = vcmask 1043456
        %v1293 = vsel %vm1291, %v1287, 0
        %1295 = vmatprep.subr.bf16.mxu0 0
        %1296 = vmatpush1.bf16.msra.mxu0 %v1293
        %1297 = vmatprep.subr.bf16.mxu0 0
        %1298 = vmatpush1.bf16.msra.mxu0 0
        %1299 = vmatprep.subr.bf16.mxu0 0
        %1300 = vmatpush1.bf16.msra.mxu0 0
        %1301 = vmatprep.subr.bf16.mxu0 0
        %1302 = vmatpush1.bf16.msra.mxu0 0
        %1303 = vmatprep.subr.bf16.mxu0 0
        %1304 = vmatpush1.bf16.msra.mxu0 0
        %1305 = vmatprep.subr.bf16.mxu0 0
        %1306 = vmatpush1.bf16.msra.mxu0 0
        %1307 = vmatprep.subr.bf16.mxu0 0
        %1308 = vmatpush1.bf16.msra.mxu0 0
        %1309 = vmatprep.subr.bf16.mxu0 0
        %1310 = vmatpush1.bf16.msra.mxu0 0
        %1311 = vmatprep.subr.bf16.mxu0 0
        %1312 = vmatpush1.bf16.msra.mxu0 0
        %1313 = vmatprep.subr.bf16.mxu0 0
        %1314 = vmatpush1.bf16.msra.mxu0 0
        %1315 = vmatprep.subr.bf16.mxu0 0
        %1316 = vmatpush1.bf16.msra.mxu0 0
        %1317 = vmatprep.subr.bf16.mxu0 0
        %1318 = vmatpush1.bf16.msra.mxu0 0
        %1319 = vmatprep.subr.bf16.mxu0 0
        %1320 = vmatpush1.bf16.msra.mxu0 0
        %1321 = vmatprep.subr.bf16.mxu0 0
        %1322 = vmatpush1.bf16.msra.mxu0 0
        %1323 = vmatprep.subr.bf16.mxu0 0
        %1324 = vmatpush1.bf16.msra.mxu0 0
        %1325 = vmatprep.subr.bf16.mxu0 0
        %1326 = vmatpush1.bf16.msra.mxu0 0
        %1327 = vmatprep.mubr.bf16.mxu0 0
        %1328 = vmatmul.mubr.bf16.gmra.mrb[0].mxu0 %v1289
        %v1329 = vpop.f32.mrb[0].mxu0
        %v1330 = vadd.f32 0.0, %v1329
        %v1331 = vpop.f32.mrb[0].mxu0
        %v1332 = vpop.f32.mrb[0].mxu0
        %v1333 = vpop.f32.mrb[0].mxu0
        %1334 = vdwg.mxu0
        %1335 = vrot.lane.b32.xlu0 %v1031, 64
        %v1336 = vpop.permute.xlu0 %1335
        %v1338 = vsel %vm1044, %v1283, 0
        %v1341 = vsel %vm1291, %v1336, 0
        %1343 = vmatprep.subr.bf16.mxu0 0
        %1344 = vmatpush1.bf16.msra.mxu0 %v1341
        %1345 = vmatprep.subr.bf16.mxu0 0
        %1346 = vmatpush1.bf16.msra.mxu0 0
        %1347 = vmatprep.subr.bf16.mxu0 0
        %1348 = vmatpush1.bf16.msra.mxu0 0
        %1349 = vmatprep.subr.bf16.mxu0 0
        %1350 = vmatpush1.bf16.msra.mxu0 0
        %1351 = vmatprep.subr.bf16.mxu0 0
        %1352 = vmatpush1.bf16.msra.mxu0 0
        %1353 = vmatprep.subr.bf16.mxu0 0
        %1354 = vmatpush1.bf16.msra.mxu0 0
        %1355 = vmatprep.subr.bf16.mxu0 0
        %1356 = vmatpush1.bf16.msra.mxu0 0
        %1357 = vmatprep.subr.bf16.mxu0 0
        %1358 = vmatpush1.bf16.msra.mxu0 0
        %1359 = vmatprep.subr.bf16.mxu0 0
        %1360 = vmatpush1.bf16.msra.mxu0 0
        %1361 = vmatprep.subr.bf16.mxu0 0
        %1362 = vmatpush1.bf16.msra.mxu0 0
        %1363 = vmatprep.subr.bf16.mxu0 0
        %1364 = vmatpush1.bf16.msra.mxu0 0
        %1365 = vmatprep.subr.bf16.mxu0 0
        %1366 = vmatpush1.bf16.msra.mxu0 0
        %1367 = vmatprep.subr.bf16.mxu0 0
        %1368 = vmatpush1.bf16.msra.mxu0 0
        %1369 = vmatprep.subr.bf16.mxu0 0
        %1370 = vmatpush1.bf16.msra.mxu0 0
        %1371 = vmatprep.subr.bf16.mxu0 0
        %1372 = vmatpush1.bf16.msra.mxu0 0
        %1373 = vmatprep.subr.bf16.mxu0 0
        %1374 = vmatpush1.bf16.msra.mxu0 0
        %1375 = vmatprep.mubr.bf16.mxu0 0
        %1376 = vmatmul.mubr.bf16.gmra.mrb[0].mxu0 %v1338
        %v1377 = vpop.f32.mrb[0].mxu0
        %v1378 = vadd.f32 0.0, %v1377
        %v1379 = vpop.f32.mrb[0].mxu0
        %v1380 = vpop.f32.mrb[0].mxu0
        %v1381 = vpop.f32.mrb[0].mxu0
        %1382 = vdwg.mxu0
        %1383 = vrot.lane.b32.xlu0 %v1032, 64
        %v1384 = vpop.permute.xlu0 %1383
        %v1386 = vsel %vm1044, %v1284, 0
        %v1389 = vsel %vm1291, %v1384, 0
        %1391 = vmatprep.subr.bf16.mxu0 0
        %1392 = vmatpush1.bf16.msra.mxu0 %v1389
        %1393 = vmatprep.subr.bf16.mxu0 0
        %1394 = vmatpush1.bf16.msra.mxu0 0
        %1395 = vmatprep.subr.bf16.mxu0 0
        %1396 = vmatpush1.bf16.msra.mxu0 0
        %1397 = vmatprep.subr.bf16.mxu0 0
        %1398 = vmatpush1.bf16.msra.mxu0 0
        %1399 = vmatprep.subr.bf16.mxu0 0
        %1400 = vmatpush1.bf16.msra.mxu0 0
        %1401 = vmatprep.subr.bf16.mxu0 0
        %1402 = vmatpush1.bf16.msra.mxu0 0
        %1403 = vmatprep.subr.bf16.mxu0 0
        %1404 = vmatpush1.bf16.msra.mxu0 0
        %1405 = vmatprep.subr.bf16.mxu0 0
        %1406 = vmatpush1.bf16.msra.mxu0 0
        %1407 = vmatprep.subr.bf16.mxu0 0
        %1408 = vmatpush1.bf16.msra.mxu0 0
        %1409 = vmatprep.subr.bf16.mxu0 0
        %1410 = vmatpush1.bf16.msra.mxu0 0
        %1411 = vmatprep.subr.bf16.mxu0 0
        %1412 = vmatpush1.bf16.msra.mxu0 0
        %1413 = vmatprep.subr.bf16.mxu0 0
        %1414 = vmatpush1.bf16.msra.mxu0 0
        %1415 = vmatprep.subr.bf16.mxu0 0
        %1416 = vmatpush1.bf16.msra.mxu0 0
        %1417 = vmatprep.subr.bf16.mxu0 0
        %1418 = vmatpush1.bf16.msra.mxu0 0
        %1419 = vmatprep.subr.bf16.mxu0 0
        %1420 = vmatpush1.bf16.msra.mxu0 0
        %1421 = vmatprep.subr.bf16.mxu0 0
        %1422 = vmatpush1.bf16.msra.mxu0 0
        %1423 = vmatprep.mubr.bf16.mxu0 0
        %1424 = vmatmul.mubr.bf16.gmra.mrb[0].mxu0 %v1386
        %v1425 = vpop.f32.mrb[0].mxu0
        %v1426 = vadd.f32 0.0, %v1425
        %v1427 = vpop.f32.mrb[0].mxu0
        %v1428 = vpop.f32.mrb[0].mxu0
        %v1429 = vpop.f32.mrb[0].mxu0
        %1430 = vdwg.mxu0
        %1431 = vrot.lane.b32.xlu0 %v1033, 64
        %v1432 = vpop.permute.xlu0 %1431
        %v1434 = vsel %vm1044, %v1285, 0
        %v1437 = vsel %vm1291, %v1432, 0
        %1439 = vmatprep.subr.bf16.mxu0 0
        %1440 = vmatpush1.bf16.msra.mxu0 %v1437
        %1441 = vmatprep.subr.bf16.mxu0 0
        %1442 = vmatpush1.bf16.msra.mxu0 0
        %1443 = vmatprep.subr.bf16.mxu0 0
        %1444 = vmatpush1.bf16.msra.mxu0 0
        %1445 = vmatprep.subr.bf16.mxu0 0
        %1446 = vmatpush1.bf16.msra.mxu0 0
        %1447 = vmatprep.subr.bf16.mxu0 0
        %1448 = vmatpush1.bf16.msra.mxu0 0
        %1449 = vmatprep.subr.bf16.mxu0 0
        %1450 = vmatpush1.bf16.msra.mxu0 0
        %1451 = vmatprep.subr.bf16.mxu0 0
        %1452 = vmatpush1.bf16.msra.mxu0 0
        %1453 = vmatprep.subr.bf16.mxu0 0
        %1454 = vmatpush1.bf16.msra.mxu0 0
        %1455 = vmatprep.subr.bf16.mxu0 0
        %1456 = vmatpush1.bf16.msra.mxu0 0
        %1457 = vmatprep.subr.bf16.mxu0 0
        %1458 = vmatpush1.bf16.msra.mxu0 0
        %1459 = vmatprep.subr.bf16.mxu0 0
        %1460 = vmatpush1.bf16.msra.mxu0 0
        %1461 = vmatprep.subr.bf16.mxu0 0
        %1462 = vmatpush1.bf16.msra.mxu0 0
        %1463 = vmatprep.subr.bf16.mxu0 0
        %1464 = vmatpush1.bf16.msra.mxu0 0
        %1465 = vmatprep.subr.bf16.mxu0 0
        %1466 = vmatpush1.bf16.msra.mxu0 0
        %1467 = vmatprep.subr.bf16.mxu0 0
        %1468 = vmatpush1.bf16.msra.mxu0 0
        %1469 = vmatprep.subr.bf16.mxu0 0
        %1470 = vmatpush1.bf16.msra.mxu0 0
        %1471 = vmatprep.mubr.bf16.mxu0 0
        %1472 = vmatmul.mubr.bf16.gmra.mrb[0].mxu0 %v1434
        %v1473 = vpop.f32.mrb[0].mxu0
        %v1474 = vadd.f32 0.0, %v1473
        %v1475 = vpop.f32.mrb[0].mxu0
        %v1476 = vpop.f32.mrb[0].mxu0
        %v1477 = vpop.f32.mrb[0].mxu0
        %1478 = vdwg.mxu0
        %1480 = vrot.lane.b32.xlu0 %v1378, 8
        %v1481 = vpop.permute.xlu0 %1480
        %1484 = vrot.lane.b32.xlu0 %v1426, 16
        %v1485 = vpop.permute.xlu0 %1484
        %1488 = vrot.lane.b32.xlu0 %v1474, 24
        %v1489 = vpop.permute.xlu0 %1488
        %v1491 = vsel %vm1044, %v1330, %v1481
        %vm1492 = vcmask 130048
        %v1493 = vsel %vm1492, %v1491, %v1485
        %vm1494 = vcmask 195584
        %v1495 = vsel %vm1494, %v1493, %v1489
        %v1496 = vpack.c.bf16 %v1495, %v1495
        %v1497 = vld [vmem:[%s768] sm:$0xf]
        %v1498 = vld [vmem:[%s768 + $0x4] sm:$0xf]
        %v1499 = vld [vmem:[%s768 + $0x8] sm:$0xf]
        %v1500 = vld [vmem:[%s768 + $0xc] sm:$0xf]
        %v1501 = vld [vmem:[%s776] sm:$0x1]
        %v1503 = vlaneseq
        %v1504 = vshrl.u32 %v1503, 7
        %v1505 = vsub.s32 0, %v1504
        %v1506 = vrot.slane %v1501, %v1505
        %v1512 = vunpack.c.l.b16 %v1497
        %v1513 = vunpack.c.l.b16 %v1498
        %v1514 = vunpack.c.l.b16 %v1499
        %v1515 = vunpack.c.l.b16 %v1500
        %v1516 = vpack.c.b16 %v1513, %v1512
        %v1517 = vpack.c.b16 %v1515, %v1514
        %v1521 = vsel %vm976, %v1496, 0
        %1523 = vmatprep.subr.bf16.mxu0 0
        %1524 = vmatpush1.bf16.msra.mxu0 %v1516
        %1525 = vmatprep.subr.bf16.mxu0 0
        %1526 = vmatpush1.bf16.msra.mxu0 %v1517
        %1527 = vmatprep.subr.bf16.mxu0 0
        %1528 = vmatpush1.bf16.msra.mxu0 0
        %1529 = vmatprep.subr.bf16.mxu0 0
        %1530 = vmatpush1.bf16.msra.mxu0 0
        %1531 = vmatprep.subr.bf16.mxu0 0
        %1532 = vmatpush1.bf16.msra.mxu0 0
        %1533 = vmatprep.subr.bf16.mxu0 0
        %1534 = vmatpush1.bf16.msra.mxu0 0
        %1535 = vmatprep.subr.bf16.mxu0 0
        %1536 = vmatpush1.bf16.msra.mxu0 0
        %1537 = vmatprep.subr.bf16.mxu0 0
        %1538 = vmatpush1.bf16.msra.mxu0 0
        %1539 = vmatprep.subr.bf16.mxu0 0
        %1540 = vmatpush1.bf16.msra.mxu0 0
        %1541 = vmatprep.subr.bf16.mxu0 0
        %1542 = vmatpush1.bf16.msra.mxu0 0
        %1543 = vmatprep.subr.bf16.mxu0 0
        %1544 = vmatpush1.bf16.msra.mxu0 0
        %1545 = vmatprep.subr.bf16.mxu0 0
        %1546 = vmatpush1.bf16.msra.mxu0 0
        %1547 = vmatprep.subr.bf16.mxu0 0
        %1548 = vmatpush1.bf16.msra.mxu0 0
        %1549 = vmatprep.subr.bf16.mxu0 0
        %1550 = vmatpush1.bf16.msra.mxu0 0
        %1551 = vmatprep.subr.bf16.mxu0 0
        %1552 = vmatpush1.bf16.msra.mxu0 0
        %1553 = vmatprep.subr.bf16.mxu0 0
        %1554 = vmatpush1.bf16.msra.mxu0 0
        %1555 = vmatprep.mubr.bf16.mxu0 0
        %1556 = vmatmul.mubr.bf16.gmra.mrb[0].mxu0 %v1521
        %v1557 = vpop.f32.mrb[0].mxu0
        %v1558 = vadd.f32 %v1506, %v1557
        %v1559 = vpop.f32.mrb[0].mxu0
        %v1560 = vpop.f32.mrb[0].mxu0
        %v1561 = vpop.f32.mrb[0].mxu0
        %1562 = vdwg.mxu0
        %v1563 = vadd.f32 %v951, %v1558
        %v1564 = vld [vmem:[%s784] sm:$0x1]
        %v1565 = vld [vmem:[%s792] sm:$0x1]
        %v1566 = vsel %vm976, %v1563, 0.0
        %1567 = vadd.xlane.f32.xlu0 %v1566
        %v1568 = vpop.xlane.xlu0 %1567
        %v1569 = vrcp.pop 32.0
        %v1570 = vmul.f32 %v1568, %v1569
        %v1571 = vsub.f32 %v1563, %v1570
        %v1572 = vmul.f32 %v1571, %v1571
        %v1573 = vsel %vm976, %v1572, 0.0
        %1574 = vadd.xlane.f32.xlu0 %v1573
        %v1575 = vpop.xlane.xlu0 %1574
        %v1576 = vmul.f32 %v1575, %v1569
        %v1577 = vadd.f32 %v1576, 1e-12
        %v1578 = vrsqrt.pop %v1577
        %v1579 = vmul.f32 %v1571, %v1578
        %v1581 = vlaneseq
        %v1582 = vshrl.u32 %v1581, 7
        %v1583 = vsub.s32 0, %v1582
        %v1584 = vrot.slane %v1564, %v1583
        %v1586 = vmul.f32 %v1579, %v1584
        %v1588 = vlaneseq
        %v1589 = vshrl.u32 %v1588, 7
        %v1590 = vsub.s32 0, %v1589
        %v1591 = vrot.slane %v1565, %v1590
        %v1593 = vadd.f32 %v1586, %v1591
        %v1594 = vpack.c.bf16 %v1593, %v1593
        %v1595 = vld [vmem:[%s801] sm:$0xf]
        %v1596 = vld [vmem:[%s801 + $0x4] sm:$0xf]
        %v1597 = vld [vmem:[%s801 + $0x8] sm:$0xf]
        %v1598 = vld [vmem:[%s801 + $0xc] sm:$0xf]
        %v1599 = vld [vmem:[%s809] sm:$0x1]
        %v1601 = vlaneseq
        %v1602 = vshrl.u32 %v1601, 7
        %v1603 = vsub.s32 0, %v1602
        %v1604 = vrot.slane %v1599, %v1603
        %v1610 = vunpack.c.l.b16 %v1595
        %v1611 = vunpack.c.l.b16 %v1596
        %v1612 = vunpack.c.l.b16 %v1597
        %v1613 = vunpack.c.l.b16 %v1598
        %v1614 = vpack.c.b16 %v1611, %v1610
        %v1615 = vpack.c.b16 %v1613, %v1612
        %v1619 = vsel %vm976, %v1594, 0
        %1621 = vmatprep.subr.bf16.mxu0 0
        %1622 = vmatpush1.bf16.msra.mxu0 %v1614
        %1623 = vmatprep.subr.bf16.mxu0 0
        %1624 = vmatpush1.bf16.msra.mxu0 %v1615
        %1625 = vmatprep.subr.bf16.mxu0 0
        %1626 = vmatpush1.bf16.msra.mxu0 0
        %1627 = vmatprep.subr.bf16.mxu0 0
        %1628 = vmatpush1.bf16.msra.mxu0 0
        %1629 = vmatprep.subr.bf16.mxu0 0
        %1630 = vmatpush1.bf16.msra.mxu0 0
        %1631 = vmatprep.subr.bf16.mxu0 0
        %1632 = vmatpush1.bf16.msra.mxu0 0
        %1633 = vmatprep.subr.bf16.mxu0 0
        %1634 = vmatpush1.bf16.msra.mxu0 0
        %1635 = vmatprep.subr.bf16.mxu0 0
        %1636 = vmatpush1.bf16.msra.mxu0 0
        %1637 = vmatprep.subr.bf16.mxu0 0
        %1638 = vmatpush1.bf16.msra.mxu0 0
        %1639 = vmatprep.subr.bf16.mxu0 0
        %1640 = vmatpush1.bf16.msra.mxu0 0
        %1641 = vmatprep.subr.bf16.mxu0 0
        %1642 = vmatpush1.bf16.msra.mxu0 0
        %1643 = vmatprep.subr.bf16.mxu0 0
        %1644 = vmatpush1.bf16.msra.mxu0 0
        %1645 = vmatprep.subr.bf16.mxu0 0
        %1646 = vmatpush1.bf16.msra.mxu0 0
        %1647 = vmatprep.subr.bf16.mxu0 0
        %1648 = vmatpush1.bf16.msra.mxu0 0
        %1649 = vmatprep.subr.bf16.mxu0 0
        %1650 = vmatpush1.bf16.msra.mxu0 0
        %1651 = vmatprep.subr.bf16.mxu0 0
        %1652 = vmatpush1.bf16.msra.mxu0 0
        %1653 = vmatprep.mubr.bf16.mxu0 0
        %1654 = vmatmul.mubr.bf16.gmra.mrb[0].mxu0 %v1619
        %v1655 = vpop.f32.mrb[0].mxu0
        %v1656 = vadd.f32 %v1604, %v1655
        %v1657 = vpop.f32.mrb[0].mxu0
        %v1658 = vpop.f32.mrb[0].mxu0
        %v1659 = vpop.f32.mrb[0].mxu0
        %1660 = vdwg.mxu0
        %v1661 = vmul.f32 %v1656, %v1656
        %v1662 = vmul.f32 %v1656, %v1661
        %v1663 = vmul.f32 %v1662, 0.044715
        %v1664 = vadd.f32 %v1656, %v1663
        %v1665 = vmul.f32 %v1664, 0.7978846
        %v1666 = vtanh.pop %v1665
        %v1667 = vadd.f32 %v1666, 1.0
        %v1668 = vmul.f32 %v1667, 0.5
        %v1669 = vmul.f32 %v1656, %v1668
        %v1670 = vpack.c.bf16 %v1669, %v1669
        %v1671 = vld [vmem:[%s818] sm:$0xf]
        %v1672 = vld [vmem:[%s818 + $0x4] sm:$0xf]
        %v1673 = vld [vmem:[%s818 + $0x8] sm:$0xf]
        %v1674 = vld [vmem:[%s818 + $0xc] sm:$0xf]
        %v1675 = vld [vmem:[%s818 + $0x10] sm:$0xf]
        %v1676 = vld [vmem:[%s818 + $0x14] sm:$0xf]
        %v1677 = vld [vmem:[%s818 + $0x18] sm:$0xf]
        %v1678 = vld [vmem:[%s818 + $0x1c] sm:$0xf]
        %v1679 = vld [vmem:[%s826] sm:$0x1]
        %v1681 = vlaneseq
        %v1682 = vshrl.u32 %v1681, 7
        %v1683 = vsub.s32 0, %v1682
        %v1684 = vrot.slane %v1679, %v1683
        %v1694 = vunpack.c.l.b16 %v1671
        %v1695 = vunpack.c.l.b16 %v1672
        %v1696 = vunpack.c.l.b16 %v1673
        %v1697 = vunpack.c.l.b16 %v1674
        %v1698 = vunpack.c.l.b16 %v1675
        %v1699 = vunpack.c.l.b16 %v1676
        %v1700 = vunpack.c.l.b16 %v1677
        %v1701 = vunpack.c.l.b16 %v1678
        %v1702 = vpack.c.b16 %v1695, %v1694
        %v1703 = vpack.c.b16 %v1697, %v1696
        %v1704 = vpack.c.b16 %v1699, %v1698
        %v1705 = vpack.c.b16 %v1701, %v1700
        %vm1710 = vcmask 523264
        %v1712 = vsel %vm1710, %v1670, 0
        %1714 = vmatprep.subr.bf16.mxu0 0
        %1715 = vmatpush1.bf16.msra.mxu0 %v1702
        %1716 = vmatprep.subr.bf16.mxu0 0
        %1717 = vmatpush1.bf16.msra.mxu0 %v1703
        %1718 = vmatprep.subr.bf16.mxu0 0
        %1719 = vmatpush1.bf16.msra.mxu0 %v1704
        %1720 = vmatprep.subr.bf16.mxu0 0
        %1721 = vmatpush1.bf16.msra.mxu0 %v1705
        %1722 = vmatprep.subr.bf16.mxu0 0
        %1723 = vmatpush1.bf16.msra.mxu0 0
        %1724 = vmatprep.subr.bf16.mxu0 0
        %1725 = vmatpush1.bf16.msra.mxu0 0
        %1726 = vmatprep.subr.bf16.mxu0 0
        %1727 = vmatpush1.bf16.msra.mxu0 0
        %1728 = vmatprep.subr.bf16.mxu0 0
        %1729 = vmatpush1.bf16.msra.mxu0 0
        %1730 = vmatprep.subr.bf16.mxu0 0
        %1731 = vmatpush1.bf16.msra.mxu0 0
        %1732 = vmatprep.subr.bf16.mxu0 0
        %1733 = vmatpush1.bf16.msra.mxu0 0
        %1734 = vmatprep.subr.bf16.mxu0 0
        %1735 = vmatpush1.bf16.msra.mxu0 0
        %1736 = vmatprep.subr.bf16.mxu0 0
        %1737 = vmatpush1.bf16.msra.mxu0 0
        %1738 = vmatprep.subr.bf16.mxu0 0
        %1739 = vmatpush1.bf16.msra.mxu0 0
        %1740 = vmatprep.subr.bf16.mxu0 0
        %1741 = vmatpush1.bf16.msra.mxu0 0
        %1742 = vmatprep.subr.bf16.mxu0 0
        %1743 = vmatpush1.bf16.msra.mxu0 0
        %1744 = vmatprep.subr.bf16.mxu0 0
        %1745 = vmatpush1.bf16.msra.mxu0 0
        %1746 = vmatprep.mubr.bf16.mxu0 0
        %1747 = vmatmul.mubr.bf16.gmra.mrb[0].mxu0 %v1712
        %v1748 = vpop.f32.mrb[0].mxu0
        %v1749 = vadd.f32 %v1684, %v1748
        %v1750 = vpop.f32.mrb[0].mxu0
        %v1751 = vpop.f32.mrb[0].mxu0
        %v1752 = vpop.f32.mrb[0].mxu0
        %1753 = vdwg.mxu0
        %v1754 = vadd.f32 %v1593, %v1749
        %v1755 = vld [vmem:[%s834] sm:$0x1]
        %v1756 = vld [vmem:[%s842] sm:$0x1]
        %v1757 = vsel %vm976, %v1754, 0.0
        %1758 = vadd.xlane.f32.xlu0 %v1757
        %v1759 = vpop.xlane.xlu0 %1758
        %v1760 = vmul.f32 %v1759, %v1569
        %v1761 = vsub.f32 %v1754, %v1760
        %v1762 = vmul.f32 %v1761, %v1761
        %v1763 = vsel %vm976, %v1762, 0.0
        %1764 = vadd.xlane.f32.xlu0 %v1763
        %v1765 = vpop.xlane.xlu0 %1764
        %v1766 = vmul.f32 %v1765, %v1569
        %v1767 = vadd.f32 %v1766, 1e-12
        %v1768 = vrsqrt.pop %v1767
        %v1769 = vmul.f32 %v1761, %v1768
        %v1771 = vlaneseq
        %v1772 = vshrl.u32 %v1771, 7
        %v1773 = vsub.s32 0, %v1772
        %v1774 = vrot.slane %v1755, %v1773
        %v1776 = vmul.f32 %v1769, %v1774
        %v1778 = vlaneseq
        %v1779 = vshrl.u32 %v1778, 7
        %v1780 = vsub.s32 0, %v1779
        %v1781 = vrot.slane %v1756, %v1780
        %v1783 = vadd.f32 %v1776, %v1781
        %1784 = vst.msk [vmem:[%s942] sm:$0xff] %vm976, %v1783
        %s1785 = sand.u32 %s436, 1
        %s1786 = scalar_lea.sflag [#allocation4], %s1785
        %s1787 = sand.u32 %s436, 1
        %s1788 = smul.addr %s1787, 8
        %s1789 = scalar_lea.vmem [#allocation25], %s1788
        // Predicated region
        $region137: #{bert_forward.1} parent=75 // pred_check
          %p1790 = pneg %p446
        $region138: #{bert_forward.1} parent=75 // pred_check_branch
          %1792 = sbr.rel (%p1790) target = $region140
        $region139: #{bert_forward.1} parent=75 // pred_region
          %s1794 = ssub.s32 128, 128
          %1795 = vsyncadd %s1786, %s1794
          %s1796 = smul.addr %s56, 128
          %s1797 = scalar_lea.hbm %s14, %s1796
          %s1799 = sshll.u32 %s1789, 4
          %s1800 = int_to_ptr.vmem [resolvable:$true] %s1799
          %1802 = dma.vmem_to_hbm [thread:$0]  %s1800, 128, %s1797, %s1786
        $region140: #{bert_forward.1} parent=75 // pred_fallthru
          _
      $region76: #{bert_forward.1} parent=5 // pred_fallthru
        _
      %p1803 = scmp.le.s32.totalorder 2, %s47
      // Predicated region
      $region141: #{bert_forward.1} parent=5 // pred_check
        %p1804 = pneg %p1803
      $region142: #{bert_forward.1} parent=5 // pred_check_branch
        %1806 = sbr.rel (%p1804) target = $region144
      $region143: #{bert_forward.1} parent=5 // pred_region
        %s1807 = ssub.s32 %s47, 2
        // Predicated region
        $region145: #{bert_forward.1} parent=143 // pred_check
          %p1808 = pneg %p452
        $region146: #{bert_forward.1} parent=143 // pred_check_branch
          %1810 = sbr.rel (%p1808) target = $region148
        $region147: #{bert_forward.1} parent=143 // pred_region
          %s1811 = sand.u32 %s437, 1
          %s1812 = scalar_lea.sflag [#allocation4], %s1811
          %s1813 = sand.u32 %s437, 1
          %s1814 = smul.addr %s1813, 8
          %s1815 = scalar_lea.vmem [#allocation25], %s1814
          %1816 = dma.done %s1812, 128
        $region148: #{bert_forward.1} parent=143 // pred_fallthru
          _
      $region144: #{bert_forward.1} parent=5 // pred_fallthru
        _
    $region6: #{bert_forward.1} parent=1 // loop_footer
      %s51 = sadd.s32 1, %s47
    $region7: #{bert_forward.1} parent=1 // loop_footer_branch
      %46 = sbr.rel target = $region3
    $region8: #{bert_forward.1} parent=1 // loop_exit
      _
    %1817 = vsyncpa [#allocation3], 1
    %s1818 = scalar_lea.sflag [#allocation3], 1
    %1819 = vsyncpa %s1818, 1
    %1820 = vsyncpa [#allocation6], 1
    %s1821 = scalar_lea.sflag [#allocation6], 1
    %1822 = vsyncpa %s1821, 1
    %1823 = vsyncpa [#allocation9], 1
    %s1824 = scalar_lea.sflag [#allocation9], 1
    %1825 = vsyncpa %s1824, 1
    %1826 = vsyncpa [#allocation12], 1
    %s1827 = scalar_lea.sflag [#allocation12], 1
    %1828 = vsyncpa %s1827, 1
    %1829 = vsyncpa [#allocation15], 1
    %s1830 = scalar_lea.sflag [#allocation15], 1
    %1831 = vsyncpa %s1830, 1
    %1832 = vsyncpa [#allocation18], 1
    %s1833 = scalar_lea.sflag [#allocation18], 1
    %1834 = vsyncpa %s1833, 1
    %1835 = vsyncpa [#allocation21], 1
    %s1836 = scalar_lea.sflag [#allocation21], 1
    %1837 = vsyncpa %s1836, 1
    %1838 = vsyncpa [#allocation24], 1
    %s1839 = scalar_lea.sflag [#allocation24], 1
    %1840 = vsyncpa %s1839, 1
    %1841 = vsyncpa [#allocation4], 1
    %s1842 = scalar_lea.sflag [#allocation4], 1
    %1843 = vsyncpa %s1842, 1

</llo_original>
